<compile_context>
chip_gen: v7x
topology: tpu7x:2x2x1
jax: 0.10.0
libtpu: 0.0.40
codegen_flags: <defaults>
</compile_context>

<pallas_src>
import math
from functools import partial

import jax
import jax.numpy as jnp
from jax import lax
from jax.experimental import pallas as pl
from jax.experimental.pallas import tpu as pltpu


_MASK_VALUE = -1e30          # large finite negative (avoids inf-inf NaN corners)
_VMEM_LIMIT = 48 * 1024 * 1024


def _pick_tile(dim, prefs):
    """Largest preferred tile that evenly divides `dim`; else the full dim."""
    for p in prefs:
        if p <= dim and dim % p == 0:
            return p
    return dim


# ----------------------------------------------------------------------------
# Tiled linear:  y = x2d @ w_t   (w_t is the pre-transposed (K, N) weight)
# bf16 operands on the MXU, f32 accumulation.
# ----------------------------------------------------------------------------
def _matmul_kernel(x_ref, w_ref, o_ref, acc_ref):
    @pl.when(pl.program_id(2) == 0)
    def _init():
        acc_ref[...] = jnp.zeros_like(acc_ref)

    acc_ref[...] += jnp.dot(
        x_ref[...], w_ref[...], preferred_element_type=jnp.float32
    )

    @pl.when(pl.program_id(2) == pl.num_programs(2) - 1)
    def _store():
        o_ref[...] = acc_ref[...].astype(o_ref.dtype)


def linear_pallas(x2d, w_t, out_dtype=jnp.bfloat16):
    x2d = x2d.astype(jnp.bfloat16)
    w_t = w_t.astype(jnp.bfloat16)
    M, K = x2d.shape
    K2, N = w_t.shape
    assert K == K2
    tm = _pick_tile(M, (512, 256, 128, 64, 32, 16, 8))
    tn = _pick_tile(N, (512, 256, 128))
    tk = _pick_tile(K, (1024, 512, 256, 128))
    grid = (M // tm, N // tn, K // tk)
    cost = pl.CostEstimate(
        flops=2 * M * N * K,
        transcendentals=0,
        bytes_accessed=2 * (M * K + K * N) + jnp.dtype(out_dtype).itemsize * M * N,
    )
    return pl.pallas_call(
        _matmul_kernel,
        out_shape=jax.ShapeDtypeStruct((M, N), out_dtype),
        grid=grid,
        in_specs=[
            pl.BlockSpec((tm, tk), lambda i, j, k: (i, k)),
            pl.BlockSpec((tk, tn), lambda i, j, k: (k, j)),
        ],
        out_specs=pl.BlockSpec((tm, tn), lambda i, j, k: (i, j)),
        scratch_shapes=[pltpu.VMEM((tm, tn), jnp.float32)],
        compiler_params=pltpu.CompilerParams(
            dimension_semantics=("parallel", "parallel", "arbitrary"),
            vmem_limit_bytes=_VMEM_LIMIT,
        ),
        cost_estimate=cost,
    )(x2d, w_t)


# ----------------------------------------------------------------------------
# Flash-style causal attention + adapter-prompt attention + per-head gating.
# q/k/v/out are (B, T, C); each (batch, head, q-tile) owns a resident output
# block selected via a 128-wide column offset; KV axis is the innermost
# "arbitrary" reduction axis.
# ----------------------------------------------------------------------------
def _flash_attn_kernel(gating_ref, q_ref, k_ref, v_ref, ak_ref, av_ref, o_ref,
                       m_scr, l_scr, acc_scr, *, scale, l_real):
    h = pl.program_id(1)
    qi = pl.program_id(2)
    kv = pl.program_id(3)
    n_kv = pl.num_programs(3)

    tq, hs = q_ref.shape
    tk = k_ref.shape[0]

    @pl.when(kv == 0)
    def _init():
        m_scr[...] = jnp.full_like(m_scr, _MASK_VALUE)
        l_scr[...] = jnp.zeros_like(l_scr)
        acc_scr[...] = jnp.zeros_like(acc_scr)

    q_start = qi * tq
    kv_start = kv * tk

    # Skip KV tiles entirely above the causal diagonal (their DMA is also
    # avoided by the clamped kv index_map below).
    @pl.when(kv_start <= q_start + (tq - 1))
    def _compute():
        q = q_ref[...] * scale                                    # bf16 (tq, hs)
        s = lax.dot_general(q, k_ref[...], (((1,), (1,)), ((), ())),
                            preferred_element_type=jnp.float32)   # (tq, tk) f32

        def update(s_val):
            m_prev = m_scr[...]
            m_new = jnp.maximum(m_prev, jnp.max(s_val, axis=-1, keepdims=True))
            alpha = jnp.exp(m_prev - m_new)
            p = jnp.exp(s_val - m_new)
            l_scr[...] = alpha * l_scr[...] + jnp.sum(p, axis=-1, keepdims=True)
            acc_scr[...] = alpha * acc_scr[...] + jnp.dot(
                p.astype(v_ref.dtype), v_ref[...],
                preferred_element_type=jnp.float32)
            m_scr[...] = m_new

        # Only diagonal-straddling tiles need the causal mask.
        straddles = q_start < kv_start + (tk - 1)

        @pl.when(straddles)
        def _masked():
            rows = q_start + lax.broadcasted_iota(jnp.int32, (tq, tk), 0)
            cols = kv_start + lax.broadcasted_iota(jnp.int32, (tq, tk), 1)
            update(jnp.where(rows >= cols, s, _MASK_VALUE))

        @pl.when(jnp.logical_not(straddles))
        def _unmasked():
            update(s)

    @pl.when(kv == n_kv - 1)
    def _finalize():
        y = acc_scr[...] * pl.reciprocal(l_scr[...], approx=True)  # (tq, hs) f32

        # Adapter-prompt attention (unmasked), padded length, gated per head.
        g = gating_ref[h]
        q = q_ref[...] * scale
        sa = lax.dot_general(q, ak_ref[...], (((1,), (1,)), ((), ())),
                             preferred_element_type=jnp.float32)   # (tq, L_pad)
        l_pad = sa.shape[1]
        if l_real < l_pad:  # mask padded adapter columns (static)
            acols = lax.broadcasted_iota(jnp.int32, (tq, l_pad), 1)
            sa = jnp.where(acols < l_real, sa, _MASK_VALUE)
        ma = jnp.max(sa, axis=-1, keepdims=True)
        pa = jnp.exp(sa - ma)
        ay = jnp.dot(pa.astype(av_ref.dtype), av_ref[...],
                     preferred_element_type=jnp.float32)
        ay = ay * pl.reciprocal(jnp.sum(pa, axis=-1, keepdims=True), approx=True)

        o_ref[...] = (y + g * ay).astype(o_ref.dtype)


def flash_attention_pallas(q, k, v, ak, av, gating, *, n_head, l_real):
    """q, k, v: (B, T, C) bf16; ak, av: (L_pad, C) bf16; gating: (n_head,) f32."""
    B, T, C = q.shape
    hs = C // n_head
    assert hs % 128 == 0 or hs == C, "head_size must be lane-aligned (multiple of 128)"
    L_pad = ak.shape[0]
    tq = _pick_tile(T, (256, 128))
    tk = _pick_tile(T, (128,))
    scale = 1.0 / math.sqrt(hs)
    grid = (B, n_head, T // tq, T // tk)

    def q_map(b, h, qi, kv):
        return (b, qi, h)

    def kv_map(b, h, qi, kv):
        # Clamp to the last causally-relevant KV tile for this q tile so
        # skipped steps re-use the already-fetched block (no new DMA).
        return (b, jnp.minimum(kv, (qi * tq + tq - 1) // tk), h)

    def a_map(b, h, qi, kv):
        return (0, h)

    kernel = partial(_flash_attn_kernel, scale=scale, l_real=l_real)

    cost = pl.CostEstimate(
        flops=2 * B * n_head * T * T * hs + 4 * B * n_head * T * L_pad * hs,
        transcendentals=B * n_head * T * (T // 2 + L_pad),
        bytes_accessed=2 * (4 * B * T * C + 2 * L_pad * C),
    )
    return pl.pallas_call(
        kernel,
        out_shape=jax.ShapeDtypeStruct((B, T, C), q.dtype),
        grid=grid,
        in_specs=[
            pl.BlockSpec(memory_space=pltpu.MemorySpace.SMEM),   # gating (n_head,)
            pl.BlockSpec((None, tq, hs), q_map),
            pl.BlockSpec((None, tk, hs), kv_map),
            pl.BlockSpec((None, tk, hs), kv_map),
            pl.BlockSpec((L_pad, hs), a_map),
            pl.BlockSpec((L_pad, hs), a_map),
        ],
        out_specs=pl.BlockSpec((None, tq, hs), q_map),
        scratch_shapes=[
            pltpu.VMEM((tq, 1), jnp.float32),    # running max m
            pltpu.VMEM((tq, 1), jnp.float32),    # running denom l
            pltpu.VMEM((tq, hs), jnp.float32),   # output accumulator
        ],
        compiler_params=pltpu.CompilerParams(
            dimension_semantics=("parallel", "parallel", "parallel", "arbitrary"),
            vmem_limit_bytes=_VMEM_LIMIT,
        ),
        cost_estimate=cost,
    )(gating, q, k, v, ak, av)


# ----------------------------------------------------------------------------
# RoPE (small elementwise glue, plain JAX — matches lit_llama apply_rope)
# ----------------------------------------------------------------------------
def build_rope_cache(seq_len, n_elem, base=10000.0, dtype=jnp.float32):
    theta = 1.0 / (base ** (jnp.arange(0, n_elem, 2, dtype=jnp.float32) / n_elem))
    seq_idx = jnp.arange(seq_len, dtype=jnp.float32)
    idx_theta = jnp.outer(seq_idx, theta)                        # (T, n_elem//2)
    return jnp.stack([jnp.cos(idx_theta), jnp.sin(idx_theta)], axis=-1).astype(dtype)


def apply_rope(x, rope_cache):
    # x: (B, T, n_head, hs), rope_cache: (T, hs//2, 2)
    B, T, H, hs = x.shape
    rc = rope_cache[:T].reshape(1, T, 1, hs // 2, 2)
    xs = x.reshape(B, T, H, hs // 2, 2)
    x0, x1 = xs[..., 0], xs[..., 1]
    c, s = rc[..., 0], rc[..., 1]
    out = jnp.stack([x0 * c - x1 * s, x1 * c + x0 * s], axis=-1)
    return out.reshape(B, T, H, hs).astype(x.dtype)


# ----------------------------------------------------------------------------
# Adapter K/V precompute (the module's adapter_kv_cache) — independent of x.
# Adapter length is padded to a lane multiple; padded rows are zeros and are
# masked inside the attention kernel.  No RoPE on the adapter, as in PyTorch.
# ----------------------------------------------------------------------------
@partial(jax.jit, static_argnames=("pad_to",))
def precompute_adapter_kv(adapter_wte, w_attn_t, *, pad_to):
    L, C = adapter_wte.shape
    wte = adapter_wte.astype(jnp.bfloat16)
    if pad_to > L:
        wte = jnp.pad(wte, ((0, pad_to - L), (0, 0)))
    pqkv = linear_pallas(wte, w_attn_t)                          # (pad_to, 3C)
    _, ak, av = jnp.split(pqkv, 3, axis=1)                       # (pad_to, C)
    return ak, av


# ----------------------------------------------------------------------------
# Full forward (kv_cache=None path; weights pre-transposed to (K, N) bf16)
# ----------------------------------------------------------------------------
@partial(jax.jit, static_argnames=("n_head", "adapter_len"))
def causal_self_attention(x, w_attn_t, w_proj_t, ak, av, gating, rope,
                          *, n_head, adapter_len):
    B, T, C = x.shape
    hs = C // n_head

    # c_attn: q, k, v projections (PyTorch Linear y = x @ W.T, no bias)
    xb = x.astype(jnp.bfloat16)
    qkv = linear_pallas(xb.reshape(B * T, C), w_attn_t).reshape(B, T, 3 * C)
    q, k, v = jnp.split(qkv, 3, axis=2)                          # (B, T, C) each
    q = apply_rope(q.reshape(B, T, n_head, hs), rope).reshape(B, T, C)
    k = apply_rope(k.reshape(B, T, n_head, hs), rope).reshape(B, T, C)

    # fused flash causal attention + adapter attention + per-head gating,
    # all in the (B, T, C) layout (no transposes).
    y = flash_attention_pallas(q, k, v, ak, av, gating,
                               n_head=n_head, l_real=adapter_len)  # (B, T, C)

    # c_proj
    y = linear_pallas(y.reshape(B * T, C), w_proj_t,
                      out_dtype=x.dtype).reshape(B, T, C)
    return y


# ----------------------------------------------------------------------------
# Pure-JAX f32 reference (for a loose numeric sanity check)
# ----------------------------------------------------------------------------
def reference_forward(x, w_attn_t, w_proj_t, adapter_wte, gating, rope, n_head):
    B, T, C = x.shape
    hs = C // n_head
    scale = 1.0 / math.sqrt(hs)
    qkv = x @ w_attn_t                                           # (B, T, 3C)
    q, k, v = jnp.split(qkv, 3, axis=-1)
    q = apply_rope(q.reshape(B, T, n_head, hs), rope).transpose(0, 2, 1, 3)
    k = apply_rope(k.reshape(B, T, n_head, hs), rope).transpose(0, 2, 1, 3)
    v = v.reshape(B, T, n_head, hs).transpose(0, 2, 1, 3)
    s = jnp.einsum("bhqd,bhkd->bhqk", q, k) * scale
    causal = jnp.tril(jnp.ones((T, T), dtype=bool))
    s = jnp.where(causal[None, None], s, -jnp.inf)
    y = jnp.einsum("bhqk,bhkd->bhqd", jax.nn.softmax(s, axis=-1), v)
    L = adapter_wte.shape[0]
    aqkv = adapter_wte @ w_attn_t                                # (L, 3C)
    _, akr, avr = jnp.split(aqkv, 3, axis=-1)
    akr = akr.reshape(L, n_head, hs).transpose(1, 0, 2)          # (H, L, hs)
    avr = avr.reshape(L, n_head, hs).transpose(1, 0, 2)
    sa = jnp.einsum("bhqd,hkd->bhqk", q, akr) * scale
    ay = jnp.einsum("bhqk,hkd->bhqd", jax.nn.softmax(sa, axis=-1), avr)
    y = y + gating.reshape(1, n_head, 1, 1) * ay
    y = y.transpose(0, 2, 1, 3).reshape(B, T, C)
    return y @ w_proj_t


# ----------------------------------------------------------------------------
if __name__ == "__main__":
    # small but TPU-friendly config consistent with the module
    B, T = 2, 128
    n_embd, n_head = 512, 4
    head_size = n_embd // n_head        # 128 (lane-aligned)
    adapter_prompt_length = 10
    adapter_pad = 128                   # pad adapter length to a lane multiple

    key = jax.random.PRNGKey(0)
    k1, k2, k3, k4, k5 = jax.random.split(key, 5)

    x = jax.random.normal(k1, (B, T, n_embd), dtype=jnp.float32)
    # nn.Linear weights are stored (out_features, in_features)
    w_attn = 0.02 * jax.random.normal(k2, (3 * n_embd, n_embd), dtype=jnp.float32)
    w_proj = 0.02 * jax.random.normal(k3, (n_embd, n_embd), dtype=jnp.float32)
    adapter_wte = 0.02 * jax.random.normal(
        k4, (adapter_prompt_length, n_embd), dtype=jnp.float32)
    # gating_factor is a learnable per-head parameter (zeros at init); use small
    # non-zero values here so the adapter path is numerically exercised.
    gating = 0.1 * jax.random.normal(k5, (n_head,), dtype=jnp.float32)

    rope = build_rope_cache(T, head_size)                        # (T, hs//2, 2)

    # pre-transpose weights to (K, N) and pre-cast to bf16 ONCE, outside jit
    w_attn_t = jnp.asarray(w_attn.T, dtype=jnp.bfloat16)         # (C, 3C)
    w_proj_t = jnp.asarray(w_proj.T, dtype=jnp.bfloat16)         # (C, C)

    # adapter K/V cache (hoisted: independent of x), padded to 128
    ak, av = precompute_adapter_kv(adapter_wte, w_attn_t, pad_to=adapter_pad)

    y = causal_self_attention(
        x, w_attn_t, w_proj_t, ak, av, gating, rope,
        n_head=n_head, adapter_len=adapter_prompt_length)
    jax.block_until_ready(y)
    assert y.shape == (B, T, n_embd)

    # loose numeric sanity check vs. pure-JAX f32 reference (bf16 MXU numerics)
    y_ref = reference_forward(x, w_attn_t.astype(jnp.float32),
                              w_proj_t.astype(jnp.float32),
                              adapter_wte, gating, rope, n_head)
    err = float(jnp.max(jnp.abs(y.astype(jnp.float32) - y_ref)))
    assert err < 5e-2, f"max abs err vs reference: {err}"
    print("KERNEL_OK")
</pallas_src>

<mosaic_0001>
module attributes {stable_mosaic.version = 11 : i64} {
  func.func @_matmul_kernel(%arg0: i32, %arg1: i32, %arg2: i32, %arg3: memref<128x512xbf16, #tpu.memory_space<vmem>>, %arg4: memref<512x512xbf16, #tpu.memory_space<vmem>>, %arg5: memref<128x512xbf16, #tpu.memory_space<vmem>>, %arg6: memref<128x512xf32, #tpu.memory_space<vmem>>) attributes {dimension_semantics = [#tpu.dimension_semantics<parallel>, #tpu.dimension_semantics<parallel>, #tpu.dimension_semantics<arbitrary>], iteration_bounds = array<i64: 1, 3, 1>, scalar_prefetch = 0 : i64, scratch_operands = 1 : i64, tpu.core_type = #tpu.core_type<tc>, window_params = [{transform_indices = @transform_0, window_bounds = array<i64: 128, 512>}, {transform_indices = @transform_1, window_bounds = array<i64: 512, 512>}, {transform_indices = @transform_2, window_bounds = array<i64: 128, 512>}]} {
    %c0_i32 = arith.constant 0 : i32
    %0 = arith.cmpi eq, %arg2, %c0_i32 : i32
    %1 = arith.extui %0 : i1 to i32
    %c0_i32_0 = arith.constant 0 : i32
    %2 = arith.cmpi ne, %1, %c0_i32_0 : i32
    scf.if %2 {
      %cst_10 = arith.constant 0.000000e+00 : f32
      %12 = vector.broadcast %cst_10 : f32 to vector<128x512xf32>
      %c0_11 = arith.constant 0 : index
      %c0_12 = arith.constant 0 : index
      %13 = vector.load %arg6[%c0_11, %c0_12] : memref<128x512xf32, #tpu.memory_space<vmem>>, vector<128x512xf32>
      tpu.vector_store %arg6[%c0_11, %c0_12], %12 {strides = array<i32>} : memref<128x512xf32, #tpu.memory_space<vmem>>, vector<128x512xf32>,
    } else {
    }
    %c0 = arith.constant 0 : index
    %c0_1 = arith.constant 0 : index
    %3 = vector.load %arg6[%c0, %c0_1] : memref<128x512xf32, #tpu.memory_space<vmem>>, vector<128x512xf32>
    %c0_2 = arith.constant 0 : index
    %c0_3 = arith.constant 0 : index
    %4 = vector.load %arg3[%c0_2, %c0_3] : memref<128x512xbf16, #tpu.memory_space<vmem>>, vector<128x512xbf16>
    %c0_4 = arith.constant 0 : index
    %c0_5 = arith.constant 0 : index
    %5 = vector.load %arg4[%c0_4, %c0_5] : memref<512x512xbf16, #tpu.memory_space<vmem>>, vector<512x512xbf16>
    %cst = arith.constant dense<0.000000e+00> : vector<128x512xf32>
    %6 = tpu.matmul %4, %5, %cst {dimension_numbers = #tpu.dot_dimension_numbers<[1], [0], [0], [1], [0, 0, 1, 1], [], []>} : vector<128x512xbf16>, vector<512x512xbf16>, vector<128x512xf32> -> vector<128x512xf32>
    %7 = arith.addf %3, %6 : vector<128x512xf32>
    %c0_6 = arith.constant 0 : index
    %c0_7 = arith.constant 0 : index
    %8 = vector.load %arg6[%c0_6, %c0_7] : memref<128x512xf32, #tpu.memory_space<vmem>>, vector<128x512xf32>
    tpu.vector_store %arg6[%c0_6, %c0_7], %7 {strides = array<i32>} : memref<128x512xf32, #tpu.memory_space<vmem>>, vector<128x512xf32>,
    %c0_i32_8 = arith.constant 0 : i32
    %9 = arith.cmpi eq, %arg2, %c0_i32_8 : i32
    %10 = arith.extui %9 : i1 to i32
    %c0_i32_9 = arith.constant 0 : i32
    %11 = arith.cmpi ne, %10, %c0_i32_9 : i32
    scf.if %11 {
      %c0_10 = arith.constant 0 : index
      %c0_11 = arith.constant 0 : index
      %12 = vector.load %arg6[%c0_10, %c0_11] : memref<128x512xf32, #tpu.memory_space<vmem>>, vector<128x512xf32>
      %13 = arith.truncf %12 : vector<128x512xf32> to vector<128x512xbf16>
      %c0_12 = arith.constant 0 : index
      %c0_13 = arith.constant 0 : index
      %14 = vector.load %arg5[%c0_12, %c0_13] : memref<128x512xbf16, #tpu.memory_space<vmem>>, vector<128x512xbf16>
      tpu.vector_store %arg5[%c0_12, %c0_13], %13 {strides = array<i32>} : memref<128x512xbf16, #tpu.memory_space<vmem>>, vector<128x512xbf16>,
    } else {
    }
    return
  }
  func.func @transform_0(%arg0: i32, %arg1: i32, %arg2: i32) -> (i32, i32) {
    %c0_i32 = arith.constant 0 : i32
    return %arg0, %arg2 : i32, i32
  }
  func.func @transform_1(%arg0: i32, %arg1: i32, %arg2: i32) -> (i32, i32) {
    %c0_i32 = arith.constant 0 : i32
    return %arg2, %arg1 : i32, i32
  }
  func.func @transform_2(%arg0: i32, %arg1: i32, %arg2: i32) -> (i32, i32) {
    %c0_i32 = arith.constant 0 : i32
    return %arg0, %arg1 : i32, i32
  }
}

</mosaic_0001>

<llo_original>
// kernel: precompute_adapter_kv.1
$region0: #{precompute_adapter_kv.1}
  #allocation0 [shape = 'u32[]', space=smem, size = 0x4, offset = 0x4, fixed_abs, tag = 'smem constant byte address 0x4 - core index']
  #allocation1 [shape = 'u32[144,128]{1,0:T(1,128)}', space=vmem, size = 0x12000, scoped, tag = 'internal scratch']
  #allocation2 [shape = 'f32[128,512]{1,0:T(8,128)}', space=vmem, size = 0x40000, scoped, tag = 'scratch operand']
  %s0 = inlined_call_operand.vmem [shape: bf16[128,512], index: 0, kind: input, shape index: {}]
  %s1 = inlined_call_operand.hbm [shape: bf16[512,1536], index: 1, kind: input, shape index: {}]
  %s2 = inlined_call_operand.vmem [shape: bf16[128,1536], index: 2, kind: output, shape index: {}]
  %s3 = sld [smem:[#allocation0]]
  $region72: #{precompute_adapter_kv.1} parent=0
    _
  %s5 = ssub.s32 1, %s3
  %s6 = scalar_select 0, %s5, %s3
  $region1: #{precompute_adapter_kv.1} parent=0
    #allocation3 [shape = 'u8[1048576]{0}', space=vmem, size = 0x100000, scoped, tag = 'input window, operand 1']
    #allocation4 [shape = 's32[2]{0}', space=sflag, size = 0x8, scoped, tag = 'scoped memory for precompute_adapter_kv.1']
    #allocation5 [shape = 'u8[262144]{0}', space=vmem, size = 0x40000, scoped, tag = 'output window, operand 0']
    %7 = vsyncpa [#allocation4], 0
    %s8 = scalar_lea.sflag [#allocation4], 1
    %9 = vsyncpa %s8, 0
    loop: start=0, step=1, limit=5
    $region2: #{precompute_adapter_kv.1} parent=1 // loop_pre_header
      _
    $region3: #{precompute_adapter_kv.1} parent=1 // loop_header
      %s11 = sphi 0, %s15
      %p12 = scmp.ge.s32.totalorder %s11, 5
      %s18 = sphi 0, %s37
      %s19 = sphi 0, %s33
      %s20 = sphi 0, %s29
      %s21 = sphi 0, %s18
      %s22 = sphi 0, %s19
      %s23 = sphi 0, %s20
      %s24 = sphi 0, %s21
      %s25 = sphi 0, %s22
      %s26 = sphi 0, %s23
      %s42 = sphi 0, %s44
      %s45 = sphi 0, %s42
      %s46 = sphi 0, %s45
      %s62 = sphi 0, %s46
      %s70 = sphi 0, %s72
      %s73 = sphi 0, %s70
      %s74 = sphi 0, %s73
      %s90 = sphi 0, %s74
      %s98 = sphi 0, %s100
      %s101 = sphi 0, %s98
      %s102 = sphi 0, %s101
      %s118 = sphi 0, %s102
    $region4: #{precompute_adapter_kv.1} parent=1 // loop_header_branch
      %14 = sbr.rel (%p12) target = $region8
    $region5: #{precompute_adapter_kv.1} parent=1 // loop_body
      %s16 = ssub.s32 %s11, 1
      %s17 = ssub.s32 %s11, 2
      %s27 = sadd.s32 1, %s20
      %p28 = scmp.ge.s32.totalorder %s27, 1
      %s29 = scalar_select %p28, 0, %s27
      %s30 = sadd.s32 1, %s19
      %s31 = scalar_select %p28, %s30, %s19
      %p32 = scmp.ge.s32.totalorder %s31, 3
      %s33 = scalar_select %p32, 0, %s31
      %s34 = sadd.s32 1, %s18
      %s35 = scalar_select %p32, %s34, %s18
      %p36 = scmp.ge.s32.totalorder %s35, 1
      %s37 = scalar_select %p36, 0, %s35
      %s38 = ssub.s32 %s18, %s37
      %s39 = ssub.s32 %s20, %s29
      %s40 = sor.u32 %s38, %s39
      %p41 = scmp.eq.s32.totalorder %s40, 0
      %s43 = sadd.s32 %s42, 1
      %s44 = scalar_select %p41, %s42, %s43
      %p47 = pneg %p41
      %p48 = scmp.eq.s32.totalorder %s11, 2
      %p49 = por %p47, %p48
      %p50 = scmp.ne.s32.totalorder %s42, %s45
      %p51 = scmp.eq.s32.totalorder %s11, 0
      %p52 = por %p50, %p51
      %p53 = scmp.ne.s32.totalorder %s42, %s45
      %p54 = scmp.eq.s32.totalorder %s16, 2
      %p55 = por %p53, %p54
      %p56 = scmp.ne.s32.totalorder %s45, %s46
      %p57 = scmp.eq.s32.totalorder %s16, 0
      %p58 = por %p56, %p57
      %p59 = scmp.ne.s32.totalorder %s45, %s46
      %p60 = scmp.eq.s32.totalorder %s17, 2
      %p61 = por %p59, %p60
      %p63 = scmp.ne.s32.totalorder %s46, %s62
      %p64 = scmp.eq.s32.totalorder %s17, 0
      %p65 = por %p63, %p64
      %s66 = ssub.s32 %s20, %s29
      %s67 = ssub.s32 %s19, %s33
      %s68 = sor.u32 %s66, %s67
      %p69 = scmp.eq.s32.totalorder %s68, 0
      %s71 = sadd.s32 %s70, 1
      %s72 = scalar_select %p69, %s70, %s71
      %p75 = pneg %p69
      %p76 = scmp.eq.s32.totalorder %s11, 2
      %p77 = por %p75, %p76
      %p78 = scmp.ne.s32.totalorder %s70, %s73
      %p79 = scmp.eq.s32.totalorder %s11, 0
      %p80 = por %p78, %p79
      %p81 = scmp.ne.s32.totalorder %s70, %s73
      %p82 = scmp.eq.s32.totalorder %s16, 2
      %p83 = por %p81, %p82
      %p84 = scmp.ne.s32.totalorder %s73, %s74
      %p85 = scmp.eq.s32.totalorder %s16, 0
      %p86 = por %p84, %p85
      %p87 = scmp.ne.s32.totalorder %s73, %s74
      %p88 = scmp.eq.s32.totalorder %s17, 2
      %p89 = por %p87, %p88
      %p91 = scmp.ne.s32.totalorder %s74, %s90
      %p92 = scmp.eq.s32.totalorder %s17, 0
      %p93 = por %p91, %p92
      %s94 = ssub.s32 %s18, %s37
      %s95 = ssub.s32 %s19, %s33
      %s96 = sor.u32 %s94, %s95
      %p97 = scmp.eq.s32.totalorder %s96, 0
      %s99 = sadd.s32 %s98, 1
      %s100 = scalar_select %p97, %s98, %s99
      %p103 = pneg %p97
      %p104 = scmp.eq.s32.totalorder %s11, 2
      %p105 = por %p103, %p104
      %p106 = scmp.ne.s32.totalorder %s98, %s101
      %p107 = scmp.eq.s32.totalorder %s11, 0
      %p108 = por %p106, %p107
      %p109 = scmp.ne.s32.totalorder %s98, %s101
      %p110 = scmp.eq.s32.totalorder %s16, 2
      %p111 = por %p109, %p110
      %p112 = scmp.ne.s32.totalorder %s101, %s102
      %p113 = scmp.eq.s32.totalorder %s16, 0
      %p114 = por %p112, %p113
      %p115 = scmp.ne.s32.totalorder %s101, %s102
      %p116 = scmp.eq.s32.totalorder %s17, 2
      %p117 = por %p115, %p116
      %p119 = scmp.ne.s32.totalorder %s102, %s118
      %p120 = scmp.eq.s32.totalorder %s17, 0
      %p121 = por %p119, %p120
      %p122 = scmp.le.s32.totalorder 1, %s11
      %p123 = scmp.lt.s32.totalorder %s11, 4
      %p124 = pnand %p122, %p123
      %p125 = pneg %p124
      // Predicated region
      $region9: #{precompute_adapter_kv.1} parent=5 // pred_check
        _
      $region10: #{precompute_adapter_kv.1} parent=5 // pred_check_branch
        %127 = sbr.rel (%p124) target = $region12
      $region11: #{precompute_adapter_kv.1} parent=5 // pred_region
        %s128 = ssub.s32 %s11, 1
        // Predicated region
        $region13: #{precompute_adapter_kv.1} parent=11 // pred_check
          %p129 = pneg %p58
        $region14: #{precompute_adapter_kv.1} parent=11 // pred_check_branch
          %131 = sbr.rel (%p129) target = $region16
        $region15: #{precompute_adapter_kv.1} parent=11 // pred_region
          %s132 = smul.u32 16, %s21
          %s133 = smul.u32 4, %s23
          %p134 = scmp.lt.s32.totalorder %s132, 15
          %s135 = scalar_select %p134, %s132, 15
          %p136 = scmp.lt.s32.totalorder %s133, 3
          %s137 = scalar_select %p136, %s133, 3
          %s138 = smul.addr %s135, 4
          %s139 = sadd.s32 %s137, %s138
          %s140 = smul.addr %s139, 4
          %s141 = scalar_lea.vmem %s0, %s140
          %s142 = smul.u32 16, %s21
          %s143 = smul.u32 4, %s23
        $region16: #{precompute_adapter_kv.1} parent=11 // pred_fallthru
          _
      $region12: #{precompute_adapter_kv.1} parent=5 // pred_fallthru
        _
      %p144 = scmp.lt.s32.totalorder %s11, 3
      // Predicated region
      $region17: #{precompute_adapter_kv.1} parent=5 // pred_check
        %p145 = pneg %p144
      $region18: #{precompute_adapter_kv.1} parent=5 // pred_check_branch
        %147 = sbr.rel (%p145) target = $region20
      $region19: #{precompute_adapter_kv.1} parent=5 // pred_region
        // Predicated region
        $region21: #{precompute_adapter_kv.1} parent=19 // pred_check
          %p148 = pneg %p80
        $region22: #{precompute_adapter_kv.1} parent=19 // pred_check_branch
          %150 = sbr.rel (%p148) target = $region24
        $region23: #{precompute_adapter_kv.1} parent=19 // pred_region
          %s151 = sand.u32 %s70, 1
          %s152 = scalar_lea.sflag [#allocation4], %s151
          %s153 = sand.u32 %s70, 1
          %s154 = smul.addr %s153, 1024
          %s155 = scalar_lea.vmem [#allocation3], %s154
          %s156 = smul.u32 64, %s20
          %s157 = smul.u32 4, %s19
          %s159 = ssub.s32 16384, 16384
          %160 = vsyncadd %s152, %s159
          %s161 = smul.addr %s156, 12
          %s162 = sadd.s32 %s157, %s161
          %s163 = smul.addr %s162, 64
          %s164 = scalar_lea.hbm %s1, %s163
          %s165 = sshll.u32 %s155, 4
          %s166 = int_to_ptr.vmem [resolvable:$true] %s165
          %171 = dma.hbm_to_vmem [thread:$0]  %s164, 16384, %s166, %s152, 768, 256, 16
        $region24: #{precompute_adapter_kv.1} parent=19 // pred_fallthru
          _
      $region20: #{precompute_adapter_kv.1} parent=5 // pred_fallthru
        _
      %p172 = scmp.le.s32.totalorder 1, %s11
      %p173 = scmp.lt.s32.totalorder %s11, 4
      %p174 = pnand %p172, %p173
      %p175 = pneg %p174
      // Predicated region
      $region25: #{precompute_adapter_kv.1} parent=5 // pred_check
        _
      $region26: #{precompute_adapter_kv.1} parent=5 // pred_check_branch
        %177 = sbr.rel (%p174) target = $region28
      $region27: #{precompute_adapter_kv.1} parent=5 // pred_region
        %s178 = ssub.s32 %s11, 1
        %s179 = sand.u32 %s73, 1
        %s180 = scalar_lea.sflag [#allocation4], %s179
        %s181 = sand.u32 %s73, 1
        %s182 = smul.addr %s181, 1024
        %s183 = scalar_lea.vmem [#allocation3], %s182
        // Predicated region
        $region29: #{precompute_adapter_kv.1} parent=27 // pred_check
          %p184 = pneg %p86
        $region30: #{precompute_adapter_kv.1} parent=27 // pred_check_branch
          %186 = sbr.rel (%p184) target = $region32
        $region31: #{precompute_adapter_kv.1} parent=27 // pred_region
          %187 = dma.done %s180, 16384
        $region32: #{precompute_adapter_kv.1} parent=27 // pred_fallthru
          _
        %s188 = smul.u32 16, %s21
        %s189 = smul.u32 4, %s23
        %p190 = scmp.lt.s32.totalorder %s188, 15
        %s191 = scalar_select %p190, %s188, 15
        %p192 = scmp.lt.s32.totalorder %s189, 3
        %s193 = scalar_select %p192, %s189, 3
        %s194 = smul.addr %s191, 4
        %s195 = sadd.s32 %s193, %s194
        %s196 = smul.addr %s195, 4
        %s197 = scalar_lea.vmem %s0, %s196
        %p198 = pneg %p58
        %p199 = pneg %p55
        %s200 = sand.u32 %s73, 1
        %s201 = scalar_lea.sflag [#allocation4], %s200
        %s202 = sand.u32 %s73, 1
        %s203 = smul.addr %s202, 1024
        %s204 = scalar_lea.vmem [#allocation3], %s203
        %p205 = pneg %p86
        %p206 = pneg %p83
        %p207 = pneg %p114
        %p208 = pneg %p111
        %s209 = sand.u32 %s101, 1
        %s210 = sand.u32 %s101, 1
        %s211 = smul.addr %s210, 256
        %s212 = scalar_lea.vmem [#allocation5], %s211
        %s213 = smul.u32 16, %s21
        %s214 = smul.u32 4, %s23
        %p215 = scmp.lt.s32.totalorder %s213, 15
        %s216 = scalar_select %p215, %s213, 15
        %p217 = scmp.lt.s32.totalorder %s214, 3
        %s218 = scalar_select %p217, %s214, 3
        %s219 = smul.addr %s216, 4
        %s220 = sadd.s32 %s218, %s219
        %s221 = smul.addr %s220, 4
        %s222 = scalar_lea.vmem %s0, %s221
        %s223 = smul.u32 16, %s21
        %s224 = smul.u32 4, %s23
        %s225 = smul.u32 64, %s23
        %s226 = smul.u32 4, %s22
        %s227 = smul.u32 16, %s21
        %s228 = smul.u32 4, %s22
        %p229 = scmp.eq.s32.totalorder %s23, 0
        // Predicated region
        $region33: #{precompute_adapter_kv.1} parent=27 // pred_check
          %p230 = pneg %p229
        $region34: #{precompute_adapter_kv.1} parent=27 // pred_check_branch
          %232 = sbr.rel (%p230) target = $region36
        $region35: #{precompute_adapter_kv.1} parent=27 // pred_region
          %233 = vst [vmem:[#allocation2] sm:$0xff] 0.0
          %234 = vst [vmem:[#allocation2 + $0x8] sm:$0xff] 0.0
          %235 = vst [vmem:[#allocation2 + $0x10] sm:$0xff] 0.0
          %236 = vst [vmem:[#allocation2 + $0x18] sm:$0xff] 0.0
          %237 = vst [vmem:[#allocation2 + $0x20] sm:$0xff] 0.0
          %238 = vst [vmem:[#allocation2 + $0x28] sm:$0xff] 0.0
          %239 = vst [vmem:[#allocation2 + $0x30] sm:$0xff] 0.0
          %240 = vst [vmem:[#allocation2 + $0x38] sm:$0xff] 0.0
          %241 = vst [vmem:[#allocation2 + $0x40] sm:$0xff] 0.0
          %242 = vst [vmem:[#allocation2 + $0x48] sm:$0xff] 0.0
          %243 = vst [vmem:[#allocation2 + $0x50] sm:$0xff] 0.0
          %244 = vst [vmem:[#allocation2 + $0x58] sm:$0xff] 0.0
          %245 = vst [vmem:[#allocation2 + $0x60] sm:$0xff] 0.0
          %246 = vst [vmem:[#allocation2 + $0x68] sm:$0xff] 0.0
          %247 = vst [vmem:[#allocation2 + $0x70] sm:$0xff] 0.0
          %248 = vst [vmem:[#allocation2 + $0x78] sm:$0xff] 0.0
          %249 = vst [vmem:[#allocation2 + $0x80] sm:$0xff] 0.0
          %250 = vst [vmem:[#allocation2 + $0x88] sm:$0xff] 0.0
          %251 = vst [vmem:[#allocation2 + $0x90] sm:$0xff] 0.0
          %252 = vst [vmem:[#allocation2 + $0x98] sm:$0xff] 0.0
          %253 = vst [vmem:[#allocation2 + $0xa0] sm:$0xff] 0.0
          %254 = vst [vmem:[#allocation2 + $0xa8] sm:$0xff] 0.0
          %255 = vst [vmem:[#allocation2 + $0xb0] sm:$0xff] 0.0
          %256 = vst [vmem:[#allocation2 + $0xb8] sm:$0xff] 0.0
          %257 = vst [vmem:[#allocation2 + $0xc0] sm:$0xff] 0.0
          %258 = vst [vmem:[#allocation2 + $0xc8] sm:$0xff] 0.0
          %259 = vst [vmem:[#allocation2 + $0xd0] sm:$0xff] 0.0
          %260 = vst [vmem:[#allocation2 + $0xd8] sm:$0xff] 0.0
          %261 = vst [vmem:[#allocation2 + $0xe0] sm:$0xff] 0.0
          %262 = vst [vmem:[#allocation2 + $0xe8] sm:$0xff] 0.0
          %263 = vst [vmem:[#allocation2 + $0xf0] sm:$0xff] 0.0
          %264 = vst [vmem:[#allocation2 + $0xf8] sm:$0xff] 0.0
          %265 = vst [vmem:[#allocation2 + $0x100] sm:$0xff] 0.0
          %266 = vst [vmem:[#allocation2 + $0x108] sm:$0xff] 0.0
          %267 = vst [vmem:[#allocation2 + $0x110] sm:$0xff] 0.0
          %268 = vst [vmem:[#allocation2 + $0x118] sm:$0xff] 0.0
          %269 = vst [vmem:[#allocation2 + $0x120] sm:$0xff] 0.0
          %270 = vst [vmem:[#allocation2 + $0x128] sm:$0xff] 0.0
          %271 = vst [vmem:[#allocation2 + $0x130] sm:$0xff] 0.0
          %272 = vst [vmem:[#allocation2 + $0x138] sm:$0xff] 0.0
          %273 = vst [vmem:[#allocation2 + $0x140] sm:$0xff] 0.0
          %274 = vst [vmem:[#allocation2 + $0x148] sm:$0xff] 0.0
          %275 = vst [vmem:[#allocation2 + $0x150] sm:$0xff] 0.0
          %276 = vst [vmem:[#allocation2 + $0x158] sm:$0xff] 0.0
          %277 = vst [vmem:[#allocation2 + $0x160] sm:$0xff] 0.0
          %278 = vst [vmem:[#allocation2 + $0x168] sm:$0xff] 0.0
          %279 = vst [vmem:[#allocation2 + $0x170] sm:$0xff] 0.0
          %280 = vst [vmem:[#allocation2 + $0x178] sm:$0xff] 0.0
          %281 = vst [vmem:[#allocation2 + $0x180] sm:$0xff] 0.0
          %282 = vst [vmem:[#allocation2 + $0x188] sm:$0xff] 0.0
          %283 = vst [vmem:[#allocation2 + $0x190] sm:$0xff] 0.0
          %284 = vst [vmem:[#allocation2 + $0x198] sm:$0xff] 0.0
          %285 = vst [vmem:[#allocation2 + $0x1a0] sm:$0xff] 0.0
          %286 = vst [vmem:[#allocation2 + $0x1a8] sm:$0xff] 0.0
          %287 = vst [vmem:[#allocation2 + $0x1b0] sm:$0xff] 0.0
          %288 = vst [vmem:[#allocation2 + $0x1b8] sm:$0xff] 0.0
          %289 = vst [vmem:[#allocation2 + $0x1c0] sm:$0xff] 0.0
          %290 = vst [vmem:[#allocation2 + $0x1c8] sm:$0xff] 0.0
          %291 = vst [vmem:[#allocation2 + $0x1d0] sm:$0xff] 0.0
          %292 = vst [vmem:[#allocation2 + $0x1d8] sm:$0xff] 0.0
          %293 = vst [vmem:[#allocation2 + $0x1e0] sm:$0xff] 0.0
          %294 = vst [vmem:[#allocation2 + $0x1e8] sm:$0xff] 0.0
          %295 = vst [vmem:[#allocation2 + $0x1f0] sm:$0xff] 0.0
          %296 = vst [vmem:[#allocation2 + $0x1f8] sm:$0xff] 0.0
        $region36: #{precompute_adapter_kv.1} parent=27 // pred_fallthru
          _
        %v297 = vld [vmem:[#allocation2] sm:$0xff]
        %v298 = vld [vmem:[#allocation2 + $0x8] sm:$0xff]
        %v299 = vld [vmem:[#allocation2 + $0x10] sm:$0xff]
        %v300 = vld [vmem:[#allocation2 + $0x18] sm:$0xff]
        %v301 = vld [vmem:[#allocation2 + $0x20] sm:$0xff]
        %v302 = vld [vmem:[#allocation2 + $0x28] sm:$0xff]
        %v303 = vld [vmem:[#allocation2 + $0x30] sm:$0xff]
        %v304 = vld [vmem:[#allocation2 + $0x38] sm:$0xff]
        %v305 = vld [vmem:[#allocation2 + $0x40] sm:$0xff]
        %v306 = vld [vmem:[#allocation2 + $0x48] sm:$0xff]
        %v307 = vld [vmem:[#allocation2 + $0x50] sm:$0xff]
        %v308 = vld [vmem:[#allocation2 + $0x58] sm:$0xff]
        %v309 = vld [vmem:[#allocation2 + $0x60] sm:$0xff]
        %v310 = vld [vmem:[#allocation2 + $0x68] sm:$0xff]
        %v311 = vld [vmem:[#allocation2 + $0x70] sm:$0xff]
        %v312 = vld [vmem:[#allocation2 + $0x78] sm:$0xff]
        %v313 = vld [vmem:[#allocation2 + $0x80] sm:$0xff]
        %v314 = vld [vmem:[#allocation2 + $0x88] sm:$0xff]
        %v315 = vld [vmem:[#allocation2 + $0x90] sm:$0xff]
        %v316 = vld [vmem:[#allocation2 + $0x98] sm:$0xff]
        %v317 = vld [vmem:[#allocation2 + $0xa0] sm:$0xff]
        %v318 = vld [vmem:[#allocation2 + $0xa8] sm:$0xff]
        %v319 = vld [vmem:[#allocation2 + $0xb0] sm:$0xff]
        %v320 = vld [vmem:[#allocation2 + $0xb8] sm:$0xff]
        %v321 = vld [vmem:[#allocation2 + $0xc0] sm:$0xff]
        %v322 = vld [vmem:[#allocation2 + $0xc8] sm:$0xff]
        %v323 = vld [vmem:[#allocation2 + $0xd0] sm:$0xff]
        %v324 = vld [vmem:[#allocation2 + $0xd8] sm:$0xff]
        %v325 = vld [vmem:[#allocation2 + $0xe0] sm:$0xff]
        %v326 = vld [vmem:[#allocation2 + $0xe8] sm:$0xff]
        %v327 = vld [vmem:[#allocation2 + $0xf0] sm:$0xff]
        %v328 = vld [vmem:[#allocation2 + $0xf8] sm:$0xff]
        %v329 = vld [vmem:[#allocation2 + $0x100] sm:$0xff]
        %v330 = vld [vmem:[#allocation2 + $0x108] sm:$0xff]
        %v331 = vld [vmem:[#allocation2 + $0x110] sm:$0xff]
        %v332 = vld [vmem:[#allocation2 + $0x118] sm:$0xff]
        %v333 = vld [vmem:[#allocation2 + $0x120] sm:$0xff]
        %v334 = vld [vmem:[#allocation2 + $0x128] sm:$0xff]
        %v335 = vld [vmem:[#allocation2 + $0x130] sm:$0xff]
        %v336 = vld [vmem:[#allocation2 + $0x138] sm:$0xff]
        %v337 = vld [vmem:[#allocation2 + $0x140] sm:$0xff]
        %v338 = vld [vmem:[#allocation2 + $0x148] sm:$0xff]
        %v339 = vld [vmem:[#allocation2 + $0x150] sm:$0xff]
        %v340 = vld [vmem:[#allocation2 + $0x158] sm:$0xff]
        %v341 = vld [vmem:[#allocation2 + $0x160] sm:$0xff]
        %v342 = vld [vmem:[#allocation2 + $0x168] sm:$0xff]
        %v343 = vld [vmem:[#allocation2 + $0x170] sm:$0xff]
        %v344 = vld [vmem:[#allocation2 + $0x178] sm:$0xff]
        %v345 = vld [vmem:[#allocation2 + $0x180] sm:$0xff]
        %v346 = vld [vmem:[#allocation2 + $0x188] sm:$0xff]
        %v347 = vld [vmem:[#allocation2 + $0x190] sm:$0xff]
        %v348 = vld [vmem:[#allocation2 + $0x198] sm:$0xff]
        %v349 = vld [vmem:[#allocation2 + $0x1a0] sm:$0xff]
        %v350 = vld [vmem:[#allocation2 + $0x1a8] sm:$0xff]
        %v351 = vld [vmem:[#allocation2 + $0x1b0] sm:$0xff]
        %v352 = vld [vmem:[#allocation2 + $0x1b8] sm:$0xff]
        %v353 = vld [vmem:[#allocation2 + $0x1c0] sm:$0xff]
        %v354 = vld [vmem:[#allocation2 + $0x1c8] sm:$0xff]
        %v355 = vld [vmem:[#allocation2 + $0x1d0] sm:$0xff]
        %v356 = vld [vmem:[#allocation2 + $0x1d8] sm:$0xff]
        %v357 = vld [vmem:[#allocation2 + $0x1e0] sm:$0xff]
        %v358 = vld [vmem:[#allocation2 + $0x1e8] sm:$0xff]
        %v359 = vld [vmem:[#allocation2 + $0x1f0] sm:$0xff]
        %v360 = vld [vmem:[#allocation2 + $0x1f8] sm:$0xff]
        %v361 = vld [vmem:[%s222] sm:$0xff]
        %v362 = vld [vmem:[%s222 + $0x8] sm:$0xff]
        %v363 = vld [vmem:[%s222 + $0x10] sm:$0xff]
        %v364 = vld [vmem:[%s222 + $0x18] sm:$0xff]
        %v365 = vld [vmem:[%s222 + $0x20] sm:$0xff]
        %v366 = vld [vmem:[%s222 + $0x28] sm:$0xff]
        %v367 = vld [vmem:[%s222 + $0x30] sm:$0xff]
        %v368 = vld [vmem:[%s222 + $0x38] sm:$0xff]
        %v369 = vld [vmem:[%s222 + $0x40] sm:$0xff]
        %v370 = vld [vmem:[%s222 + $0x48] sm:$0xff]
        %v371 = vld [vmem:[%s222 + $0x50] sm:$0xff]
        %v372 = vld [vmem:[%s222 + $0x58] sm:$0xff]
        %v373 = vld [vmem:[%s222 + $0x60] sm:$0xff]
        %v374 = vld [vmem:[%s222 + $0x68] sm:$0xff]
        %v375 = vld [vmem:[%s222 + $0x70] sm:$0xff]
        %v376 = vld [vmem:[%s222 + $0x78] sm:$0xff]
        %v377 = vld [vmem:[%s222 + $0x80] sm:$0xff]
        %v378 = vld [vmem:[%s222 + $0x88] sm:$0xff]
        %v379 = vld [vmem:[%s222 + $0x90] sm:$0xff]
        %v380 = vld [vmem:[%s222 + $0x98] sm:$0xff]
        %v381 = vld [vmem:[%s222 + $0xa0] sm:$0xff]
        %v382 = vld [vmem:[%s222 + $0xa8] sm:$0xff]
        %v383 = vld [vmem:[%s222 + $0xb0] sm:$0xff]
        %v384 = vld [vmem:[%s222 + $0xb8] sm:$0xff]
        %v385 = vld [vmem:[%s222 + $0xc0] sm:$0xff]
        %v386 = vld [vmem:[%s222 + $0xc8] sm:$0xff]
        %v387 = vld [vmem:[%s222 + $0xd0] sm:$0xff]
        %v388 = vld [vmem:[%s222 + $0xd8] sm:$0xff]
        %v389 = vld [vmem:[%s222 + $0xe0] sm:$0xff]
        %v390 = vld [vmem:[%s222 + $0xe8] sm:$0xff]
        %v391 = vld [vmem:[%s222 + $0xf0] sm:$0xff]
        %v392 = vld [vmem:[%s222 + $0xf8] sm:$0xff]
        %v393 = vld [vmem:[%s183] sm:$0xff]
        %v394 = vld [vmem:[%s183 + $0x8] sm:$0xff]
        %v395 = vld [vmem:[%s183 + $0x10] sm:$0xff]
        %v396 = vld [vmem:[%s183 + $0x18] sm:$0xff]
        %v397 = vld [vmem:[%s183 + $0x20] sm:$0xff]
        %v398 = vld [vmem:[%s183 + $0x28] sm:$0xff]
        %v399 = vld [vmem:[%s183 + $0x30] sm:$0xff]
        %v400 = vld [vmem:[%s183 + $0x38] sm:$0xff]
        %v401 = vld [vmem:[%s183 + $0x40] sm:$0xff]
        %v402 = vld [vmem:[%s183 + $0x48] sm:$0xff]
        %v403 = vld [vmem:[%s183 + $0x50] sm:$0xff]
        %v404 = vld [vmem:[%s183 + $0x58] sm:$0xff]
        %v405 = vld [vmem:[%s183 + $0x60] sm:$0xff]
        %v406 = vld [vmem:[%s183 + $0x68] sm:$0xff]
        %v407 = vld [vmem:[%s183 + $0x70] sm:$0xff]
        %v408 = vld [vmem:[%s183 + $0x78] sm:$0xff]
        %v409 = vld [vmem:[%s183 + $0x80] sm:$0xff]
        %v410 = vld [vmem:[%s183 + $0x88] sm:$0xff]
        %v411 = vld [vmem:[%s183 + $0x90] sm:$0xff]
        %v412 = vld [vmem:[%s183 + $0x98] sm:$0xff]
        %v413 = vld [vmem:[%s183 + $0xa0] sm:$0xff]
        %v414 = vld [vmem:[%s183 + $0xa8] sm:$0xff]
        %v415 = vld [vmem:[%s183 + $0xb0] sm:$0xff]
        %v416 = vld [vmem:[%s183 + $0xb8] sm:$0xff]
        %v417 = vld [vmem:[%s183 + $0xc0] sm:$0xff]
        %v418 = vld [vmem:[%s183 + $0xc8] sm:$0xff]
        %v419 = vld [vmem:[%s183 + $0xd0] sm:$0xff]
        %v420 = vld [vmem:[%s183 + $0xd8] sm:$0xff]
        %v421 = vld [vmem:[%s183 + $0xe0] sm:$0xff]
        %v422 = vld [vmem:[%s183 + $0xe8] sm:$0xff]
        %v423 = vld [vmem:[%s183 + $0xf0] sm:$0xff]
        %v424 = vld [vmem:[%s183 + $0xf8] sm:$0xff]
        %v425 = vld [vmem:[%s183 + $0x100] sm:$0xff]
        %v426 = vld [vmem:[%s183 + $0x108] sm:$0xff]
        %v427 = vld [vmem:[%s183 + $0x110] sm:$0xff]
        %v428 = vld [vmem:[%s183 + $0x118] sm:$0xff]
        %v429 = vld [vmem:[%s183 + $0x120] sm:$0xff]
        %v430 = vld [vmem:[%s183 + $0x128] sm:$0xff]
        %v431 = vld [vmem:[%s183 + $0x130] sm:$0xff]
        %v432 = vld [vmem:[%s183 + $0x138] sm:$0xff]
        %v433 = vld [vmem:[%s183 + $0x140] sm:$0xff]
        %v434 = vld [vmem:[%s183 + $0x148] sm:$0xff]
        %v435 = vld [vmem:[%s183 + $0x150] sm:$0xff]
        %v436 = vld [vmem:[%s183 + $0x158] sm:$0xff]
        %v437 = vld [vmem:[%s183 + $0x160] sm:$0xff]
        %v438 = vld [vmem:[%s183 + $0x168] sm:$0xff]
        %v439 = vld [vmem:[%s183 + $0x170] sm:$0xff]
        %v440 = vld [vmem:[%s183 + $0x178] sm:$0xff]
        %v441 = vld [vmem:[%s183 + $0x180] sm:$0xff]
        %v442 = vld [vmem:[%s183 + $0x188] sm:$0xff]
        %v443 = vld [vmem:[%s183 + $0x190] sm:$0xff]
        %v444 = vld [vmem:[%s183 + $0x198] sm:$0xff]
        %v445 = vld [vmem:[%s183 + $0x1a0] sm:$0xff]
        %v446 = vld [vmem:[%s183 + $0x1a8] sm:$0xff]
        %v447 = vld [vmem:[%s183 + $0x1b0] sm:$0xff]
        %v448 = vld [vmem:[%s183 + $0x1b8] sm:$0xff]
        %v449 = vld [vmem:[%s183 + $0x1c0] sm:$0xff]
        %v450 = vld [vmem:[%s183 + $0x1c8] sm:$0xff]
        %v451 = vld [vmem:[%s183 + $0x1d0] sm:$0xff]
        %v452 = vld [vmem:[%s183 + $0x1d8] sm:$0xff]
        %v453 = vld [vmem:[%s183 + $0x1e0] sm:$0xff]
        %v454 = vld [vmem:[%s183 + $0x1e8] sm:$0xff]
        %v455 = vld [vmem:[%s183 + $0x1f0] sm:$0xff]
        %v456 = vld [vmem:[%s183 + $0x1f8] sm:$0xff]
        %v457 = vld [vmem:[%s183 + $0x200] sm:$0xff]
        %v458 = vld [vmem:[%s183 + $0x208] sm:$0xff]
        %v459 = vld [vmem:[%s183 + $0x210] sm:$0xff]
        %v460 = vld [vmem:[%s183 + $0x218] sm:$0xff]
        %v461 = vld [vmem:[%s183 + $0x220] sm:$0xff]
        %v462 = vld [vmem:[%s183 + $0x228] sm:$0xff]
        %v463 = vld [vmem:[%s183 + $0x230] sm:$0xff]
        %v464 = vld [vmem:[%s183 + $0x238] sm:$0xff]
        %v465 = vld [vmem:[%s183 + $0x240] sm:$0xff]
        %v466 = vld [vmem:[%s183 + $0x248] sm:$0xff]
        %v467 = vld [vmem:[%s183 + $0x250] sm:$0xff]
        %v468 = vld [vmem:[%s183 + $0x258] sm:$0xff]
        %v469 = vld [vmem:[%s183 + $0x260] sm:$0xff]
        %v470 = vld [vmem:[%s183 + $0x268] sm:$0xff]
        %v471 = vld [vmem:[%s183 + $0x270] sm:$0xff]
        %v472 = vld [vmem:[%s183 + $0x278] sm:$0xff]
        %v473 = vld [vmem:[%s183 + $0x280] sm:$0xff]
        %v474 = vld [vmem:[%s183 + $0x288] sm:$0xff]
        %v475 = vld [vmem:[%s183 + $0x290] sm:$0xff]
        %v476 = vld [vmem:[%s183 + $0x298] sm:$0xff]
        %v477 = vld [vmem:[%s183 + $0x2a0] sm:$0xff]
        %v478 = vld [vmem:[%s183 + $0x2a8] sm:$0xff]
        %v479 = vld [vmem:[%s183 + $0x2b0] sm:$0xff]
        %v480 = vld [vmem:[%s183 + $0x2b8] sm:$0xff]
        %v481 = vld [vmem:[%s183 + $0x2c0] sm:$0xff]
        %v482 = vld [vmem:[%s183 + $0x2c8] sm:$0xff]
        %v483 = vld [vmem:[%s183 + $0x2d0] sm:$0xff]
        %v484 = vld [vmem:[%s183 + $0x2d8] sm:$0xff]
        %v485 = vld [vmem:[%s183 + $0x2e0] sm:$0xff]
        %v486 = vld [vmem:[%s183 + $0x2e8] sm:$0xff]
        %v487 = vld [vmem:[%s183 + $0x2f0] sm:$0xff]
        %v488 = vld [vmem:[%s183 + $0x2f8] sm:$0xff]
        %v489 = vld [vmem:[%s183 + $0x300] sm:$0xff]
        %v490 = vld [vmem:[%s183 + $0x308] sm:$0xff]
        %v491 = vld [vmem:[%s183 + $0x310] sm:$0xff]
        %v492 = vld [vmem:[%s183 + $0x318] sm:$0xff]
        %v493 = vld [vmem:[%s183 + $0x320] sm:$0xff]
        %v494 = vld [vmem:[%s183 + $0x328] sm:$0xff]
        %v495 = vld [vmem:[%s183 + $0x330] sm:$0xff]
        %v496 = vld [vmem:[%s183 + $0x338] sm:$0xff]
        %v497 = vld [vmem:[%s183 + $0x340] sm:$0xff]
        %v498 = vld [vmem:[%s183 + $0x348] sm:$0xff]
        %v499 = vld [vmem:[%s183 + $0x350] sm:$0xff]
        %v500 = vld [vmem:[%s183 + $0x358] sm:$0xff]
        %v501 = vld [vmem:[%s183 + $0x360] sm:$0xff]
        %v502 = vld [vmem:[%s183 + $0x368] sm:$0xff]
        %v503 = vld [vmem:[%s183 + $0x370] sm:$0xff]
        %v504 = vld [vmem:[%s183 + $0x378] sm:$0xff]
        %v505 = vld [vmem:[%s183 + $0x380] sm:$0xff]
        %v506 = vld [vmem:[%s183 + $0x388] sm:$0xff]
        %v507 = vld [vmem:[%s183 + $0x390] sm:$0xff]
        %v508 = vld [vmem:[%s183 + $0x398] sm:$0xff]
        %v509 = vld [vmem:[%s183 + $0x3a0] sm:$0xff]
        %v510 = vld [vmem:[%s183 + $0x3a8] sm:$0xff]
        %v511 = vld [vmem:[%s183 + $0x3b0] sm:$0xff]
        %v512 = vld [vmem:[%s183 + $0x3b8] sm:$0xff]
        %v513 = vld [vmem:[%s183 + $0x3c0] sm:$0xff]
        %v514 = vld [vmem:[%s183 + $0x3c8] sm:$0xff]
        %v515 = vld [vmem:[%s183 + $0x3d0] sm:$0xff]
        %v516 = vld [vmem:[%s183 + $0x3d8] sm:$0xff]
        %v517 = vld [vmem:[%s183 + $0x3e0] sm:$0xff]
        %v518 = vld [vmem:[%s183 + $0x3e8] sm:$0xff]
        %v519 = vld [vmem:[%s183 + $0x3f0] sm:$0xff]
        %v520 = vld [vmem:[%s183 + $0x3f8] sm:$0xff]
        %v553 = vunpack.c.l.b16 %v361
        %v554 = vunpack.c.h.b16 %v361
        %v555 = vunpack.c.l.b16 %v362
        %v556 = vunpack.c.h.b16 %v362
        %v557 = vunpack.c.l.b16 %v363
        %v558 = vunpack.c.h.b16 %v363
        %v559 = vunpack.c.l.b16 %v364
        %v560 = vunpack.c.h.b16 %v364
        %v561 = vunpack.c.l.b16 %v365
        %v562 = vunpack.c.h.b16 %v365
        %v563 = vunpack.c.l.b16 %v366
        %v564 = vunpack.c.h.b16 %v366
        %v565 = vunpack.c.l.b16 %v367
        %v566 = vunpack.c.h.b16 %v367
        %v567 = vunpack.c.l.b16 %v368
        %v568 = vunpack.c.h.b16 %v368
        %v569 = vunpack.c.l.b16 %v369
        %v570 = vunpack.c.h.b16 %v369
        %v571 = vunpack.c.l.b16 %v370
        %v572 = vunpack.c.h.b16 %v370
        %v573 = vunpack.c.l.b16 %v371
        %v574 = vunpack.c.h.b16 %v371
        %v575 = vunpack.c.l.b16 %v372
        %v576 = vunpack.c.h.b16 %v372
        %v577 = vunpack.c.l.b16 %v373
        %v578 = vunpack.c.h.b16 %v373
        %v579 = vunpack.c.l.b16 %v374
        %v580 = vunpack.c.h.b16 %v374
        %v581 = vunpack.c.l.b16 %v375
        %v582 = vunpack.c.h.b16 %v375
        %v583 = vunpack.c.l.b16 %v376
        %v584 = vunpack.c.h.b16 %v376
        %v585 = vunpack.c.l.b16 %v377
        %v586 = vunpack.c.h.b16 %v377
        %v587 = vunpack.c.l.b16 %v378
        %v588 = vunpack.c.h.b16 %v378
        %v589 = vunpack.c.l.b16 %v379
        %v590 = vunpack.c.h.b16 %v379
        %v591 = vunpack.c.l.b16 %v380
        %v592 = vunpack.c.h.b16 %v380
        %v593 = vunpack.c.l.b16 %v381
        %v594 = vunpack.c.h.b16 %v381
        %v595 = vunpack.c.l.b16 %v382
        %v596 = vunpack.c.h.b16 %v382
        %v597 = vunpack.c.l.b16 %v383
        %v598 = vunpack.c.h.b16 %v383
        %v599 = vunpack.c.l.b16 %v384
        %v600 = vunpack.c.h.b16 %v384
        %v601 = vunpack.c.l.b16 %v385
        %v602 = vunpack.c.h.b16 %v385
        %v603 = vunpack.c.l.b16 %v386
        %v604 = vunpack.c.h.b16 %v386
        %v605 = vunpack.c.l.b16 %v387
        %v606 = vunpack.c.h.b16 %v387
        %v607 = vunpack.c.l.b16 %v388
        %v608 = vunpack.c.h.b16 %v388
        %v609 = vunpack.c.l.b16 %v389
        %v610 = vunpack.c.h.b16 %v389
        %v611 = vunpack.c.l.b16 %v390
        %v612 = vunpack.c.h.b16 %v390
        %v613 = vunpack.c.l.b16 %v391
        %v614 = vunpack.c.h.b16 %v391
        %v615 = vunpack.c.l.b16 %v392
        %v616 = vunpack.c.h.b16 %v392
        %v617 = vpack.c.b16 %v557, %v553
        %v618 = vpack.c.b16 %v558, %v554
        %v619 = vpack.c.b16 %v559, %v555
        %v620 = vpack.c.b16 %v560, %v556
        %v621 = vpack.c.b16 %v565, %v561
        %v622 = vpack.c.b16 %v566, %v562
        %v623 = vpack.c.b16 %v567, %v563
        %v624 = vpack.c.b16 %v568, %v564
        %v625 = vpack.c.b16 %v573, %v569
        %v626 = vpack.c.b16 %v574, %v570
        %v627 = vpack.c.b16 %v575, %v571
        %v628 = vpack.c.b16 %v576, %v572
        %v629 = vpack.c.b16 %v581, %v577
        %v630 = vpack.c.b16 %v582, %v578
        %v631 = vpack.c.b16 %v583, %v579
        %v632 = vpack.c.b16 %v584, %v580
        %v633 = vpack.c.b16 %v589, %v585
        %v634 = vpack.c.b16 %v590, %v586
        %v635 = vpack.c.b16 %v591, %v587
        %v636 = vpack.c.b16 %v592, %v588
        %v637 = vpack.c.b16 %v597, %v593
        %v638 = vpack.c.b16 %v598, %v594
        %v639 = vpack.c.b16 %v599, %v595
        %v640 = vpack.c.b16 %v600, %v596
        %v641 = vpack.c.b16 %v605, %v601
        %v642 = vpack.c.b16 %v606, %v602
        %v643 = vpack.c.b16 %v607, %v603
        %v644 = vpack.c.b16 %v608, %v604
        %v645 = vpack.c.b16 %v613, %v609
        %v646 = vpack.c.b16 %v614, %v610
        %v647 = vpack.c.b16 %v615, %v611
        %v648 = vpack.c.b16 %v616, %v612
        %v809 = vunpack.c.l.b16 %v393
        %v810 = vunpack.c.h.b16 %v393
        %v811 = vunpack.c.l.b16 %v394
        %v812 = vunpack.c.h.b16 %v394
        %v813 = vunpack.c.l.b16 %v395
        %v814 = vunpack.c.h.b16 %v395
        %v815 = vunpack.c.l.b16 %v396
        %v816 = vunpack.c.h.b16 %v396
        %v817 = vunpack.c.l.b16 %v397
        %v818 = vunpack.c.h.b16 %v397
        %v819 = vunpack.c.l.b16 %v398
        %v820 = vunpack.c.h.b16 %v398
        %v821 = vunpack.c.l.b16 %v399
        %v822 = vunpack.c.h.b16 %v399
        %v823 = vunpack.c.l.b16 %v400
        %v824 = vunpack.c.h.b16 %v400
        %v825 = vunpack.c.l.b16 %v401
        %v826 = vunpack.c.h.b16 %v401
        %v827 = vunpack.c.l.b16 %v402
        %v828 = vunpack.c.h.b16 %v402
        %v829 = vunpack.c.l.b16 %v403
        %v830 = vunpack.c.h.b16 %v403
        %v831 = vunpack.c.l.b16 %v404
        %v832 = vunpack.c.h.b16 %v404
        %v833 = vunpack.c.l.b16 %v405
        %v834 = vunpack.c.h.b16 %v405
        %v835 = vunpack.c.l.b16 %v406
        %v836 = vunpack.c.h.b16 %v406
        %v837 = vunpack.c.l.b16 %v407
        %v838 = vunpack.c.h.b16 %v407
        %v839 = vunpack.c.l.b16 %v408
        %v840 = vunpack.c.h.b16 %v408
        %v841 = vunpack.c.l.b16 %v409
        %v842 = vunpack.c.h.b16 %v409
        %v843 = vunpack.c.l.b16 %v410
        %v844 = vunpack.c.h.b16 %v410
        %v845 = vunpack.c.l.b16 %v411
        %v846 = vunpack.c.h.b16 %v411
        %v847 = vunpack.c.l.b16 %v412
        %v848 = vunpack.c.h.b16 %v412
        %v849 = vunpack.c.l.b16 %v413
        %v850 = vunpack.c.h.b16 %v413
        %v851 = vunpack.c.l.b16 %v414
        %v852 = vunpack.c.h.b16 %v414
        %v853 = vunpack.c.l.b16 %v415
        %v854 = vunpack.c.h.b16 %v415
        %v855 = vunpack.c.l.b16 %v416
        %v856 = vunpack.c.h.b16 %v416
        %v857 = vunpack.c.l.b16 %v417
        %v858 = vunpack.c.h.b16 %v417
        %v859 = vunpack.c.l.b16 %v418
        %v860 = vunpack.c.h.b16 %v418
        %v861 = vunpack.c.l.b16 %v419
        %v862 = vunpack.c.h.b16 %v419
        %v863 = vunpack.c.l.b16 %v420
        %v864 = vunpack.c.h.b16 %v420
        %v865 = vunpack.c.l.b16 %v421
        %v866 = vunpack.c.h.b16 %v421
        %v867 = vunpack.c.l.b16 %v422
        %v868 = vunpack.c.h.b16 %v422
        %v869 = vunpack.c.l.b16 %v423
        %v870 = vunpack.c.h.b16 %v423
        %v871 = vunpack.c.l.b16 %v424
        %v872 = vunpack.c.h.b16 %v424
        %v873 = vunpack.c.l.b16 %v425
        %v874 = vunpack.c.h.b16 %v425
        %v875 = vunpack.c.l.b16 %v426
        %v876 = vunpack.c.h.b16 %v426
        %v877 = vunpack.c.l.b16 %v427
        %v878 = vunpack.c.h.b16 %v427
        %v879 = vunpack.c.l.b16 %v428
        %v880 = vunpack.c.h.b16 %v428
        %v881 = vunpack.c.l.b16 %v429
        %v882 = vunpack.c.h.b16 %v429
        %v883 = vunpack.c.l.b16 %v430
        %v884 = vunpack.c.h.b16 %v430
        %v885 = vunpack.c.l.b16 %v431
        %v886 = vunpack.c.h.b16 %v431
        %v887 = vunpack.c.l.b16 %v432
        %v888 = vunpack.c.h.b16 %v432
        %v889 = vunpack.c.l.b16 %v433
        %v890 = vunpack.c.h.b16 %v433
        %v891 = vunpack.c.l.b16 %v434
        %v892 = vunpack.c.h.b16 %v434
        %v893 = vunpack.c.l.b16 %v435
        %v894 = vunpack.c.h.b16 %v435
        %v895 = vunpack.c.l.b16 %v436
        %v896 = vunpack.c.h.b16 %v436
        %v897 = vunpack.c.l.b16 %v437
        %v898 = vunpack.c.h.b16 %v437
        %v899 = vunpack.c.l.b16 %v438
        %v900 = vunpack.c.h.b16 %v438
        %v901 = vunpack.c.l.b16 %v439
        %v902 = vunpack.c.h.b16 %v439
        %v903 = vunpack.c.l.b16 %v440
        %v904 = vunpack.c.h.b16 %v440
        %v905 = vunpack.c.l.b16 %v441
        %v906 = vunpack.c.h.b16 %v441
        %v907 = vunpack.c.l.b16 %v442
        %v908 = vunpack.c.h.b16 %v442
        %v909 = vunpack.c.l.b16 %v443
        %v910 = vunpack.c.h.b16 %v443
        %v911 = vunpack.c.l.b16 %v444
        %v912 = vunpack.c.h.b16 %v444
        %v913 = vunpack.c.l.b16 %v445
        %v914 = vunpack.c.h.b16 %v445
        %v915 = vunpack.c.l.b16 %v446
        %v916 = vunpack.c.h.b16 %v446
        %v917 = vunpack.c.l.b16 %v447
        %v918 = vunpack.c.h.b16 %v447
        %v919 = vunpack.c.l.b16 %v448
        %v920 = vunpack.c.h.b16 %v448
        %v921 = vunpack.c.l.b16 %v449
        %v922 = vunpack.c.h.b16 %v449
        %v923 = vunpack.c.l.b16 %v450
        %v924 = vunpack.c.h.b16 %v450
        %v925 = vunpack.c.l.b16 %v451
        %v926 = vunpack.c.h.b16 %v451
        %v927 = vunpack.c.l.b16 %v452
        %v928 = vunpack.c.h.b16 %v452
        %v929 = vunpack.c.l.b16 %v453
        %v930 = vunpack.c.h.b16 %v453
        %v931 = vunpack.c.l.b16 %v454
        %v932 = vunpack.c.h.b16 %v454
        %v933 = vunpack.c.l.b16 %v455
        %v934 = vunpack.c.h.b16 %v455
        %v935 = vunpack.c.l.b16 %v456
        %v936 = vunpack.c.h.b16 %v456
        %v937 = vunpack.c.l.b16 %v457
        %v938 = vunpack.c.h.b16 %v457
        %v939 = vunpack.c.l.b16 %v458
        %v940 = vunpack.c.h.b16 %v458
        %v941 = vunpack.c.l.b16 %v459
        %v942 = vunpack.c.h.b16 %v459
        %v943 = vunpack.c.l.b16 %v460
        %v944 = vunpack.c.h.b16 %v460
        %v945 = vunpack.c.l.b16 %v461
        %v946 = vunpack.c.h.b16 %v461
        %v947 = vunpack.c.l.b16 %v462
        %v948 = vunpack.c.h.b16 %v462
        %v949 = vunpack.c.l.b16 %v463
        %v950 = vunpack.c.h.b16 %v463
        %v951 = vunpack.c.l.b16 %v464
        %v952 = vunpack.c.h.b16 %v464
        %v953 = vunpack.c.l.b16 %v465
        %v954 = vunpack.c.h.b16 %v465
        %v955 = vunpack.c.l.b16 %v466
        %v956 = vunpack.c.h.b16 %v466
        %v957 = vunpack.c.l.b16 %v467
        %v958 = vunpack.c.h.b16 %v467
        %v959 = vunpack.c.l.b16 %v468
        %v960 = vunpack.c.h.b16 %v468
        %v961 = vunpack.c.l.b16 %v469
        %v962 = vunpack.c.h.b16 %v469
        %v963 = vunpack.c.l.b16 %v470
        %v964 = vunpack.c.h.b16 %v470
        %v965 = vunpack.c.l.b16 %v471
        %v966 = vunpack.c.h.b16 %v471
        %v967 = vunpack.c.l.b16 %v472
        %v968 = vunpack.c.h.b16 %v472
        %v969 = vunpack.c.l.b16 %v473
        %v970 = vunpack.c.h.b16 %v473
        %v971 = vunpack.c.l.b16 %v474
        %v972 = vunpack.c.h.b16 %v474
        %v973 = vunpack.c.l.b16 %v475
        %v974 = vunpack.c.h.b16 %v475
        %v975 = vunpack.c.l.b16 %v476
        %v976 = vunpack.c.h.b16 %v476
        %v977 = vunpack.c.l.b16 %v477
        %v978 = vunpack.c.h.b16 %v477
        %v979 = vunpack.c.l.b16 %v478
        %v980 = vunpack.c.h.b16 %v478
        %v981 = vunpack.c.l.b16 %v479
        %v982 = vunpack.c.h.b16 %v479
        %v983 = vunpack.c.l.b16 %v480
        %v984 = vunpack.c.h.b16 %v480
        %v985 = vunpack.c.l.b16 %v481
        %v986 = vunpack.c.h.b16 %v481
        %v987 = vunpack.c.l.b16 %v482
        %v988 = vunpack.c.h.b16 %v482
        %v989 = vunpack.c.l.b16 %v483
        %v990 = vunpack.c.h.b16 %v483
        %v991 = vunpack.c.l.b16 %v484
        %v992 = vunpack.c.h.b16 %v484
        %v993 = vunpack.c.l.b16 %v485
        %v994 = vunpack.c.h.b16 %v485
        %v995 = vunpack.c.l.b16 %v486
        %v996 = vunpack.c.h.b16 %v486
        %v997 = vunpack.c.l.b16 %v487
        %v998 = vunpack.c.h.b16 %v487
        %v999 = vunpack.c.l.b16 %v488
        %v1000 = vunpack.c.h.b16 %v488
        %v1001 = vunpack.c.l.b16 %v489
        %v1002 = vunpack.c.h.b16 %v489
        %v1003 = vunpack.c.l.b16 %v490
        %v1004 = vunpack.c.h.b16 %v490
        %v1005 = vunpack.c.l.b16 %v491
        %v1006 = vunpack.c.h.b16 %v491
        %v1007 = vunpack.c.l.b16 %v492
        %v1008 = vunpack.c.h.b16 %v492
        %v1009 = vunpack.c.l.b16 %v493
        %v1010 = vunpack.c.h.b16 %v493
        %v1011 = vunpack.c.l.b16 %v494
        %v1012 = vunpack.c.h.b16 %v494
        %v1013 = vunpack.c.l.b16 %v495
        %v1014 = vunpack.c.h.b16 %v495
        %v1015 = vunpack.c.l.b16 %v496
        %v1016 = vunpack.c.h.b16 %v496
        %v1017 = vunpack.c.l.b16 %v497
        %v1018 = vunpack.c.h.b16 %v497
        %v1019 = vunpack.c.l.b16 %v498
        %v1020 = vunpack.c.h.b16 %v498
        %v1021 = vunpack.c.l.b16 %v499
        %v1022 = vunpack.c.h.b16 %v499
        %v1023 = vunpack.c.l.b16 %v500
        %v1024 = vunpack.c.h.b16 %v500
        %v1025 = vunpack.c.l.b16 %v501
        %v1026 = vunpack.c.h.b16 %v501
        %v1027 = vunpack.c.l.b16 %v502
        %v1028 = vunpack.c.h.b16 %v502
        %v1029 = vunpack.c.l.b16 %v503
        %v1030 = vunpack.c.h.b16 %v503
        %v1031 = vunpack.c.l.b16 %v504
        %v1032 = vunpack.c.h.b16 %v504
        %v1033 = vunpack.c.l.b16 %v505
        %v1034 = vunpack.c.h.b16 %v505
        %v1035 = vunpack.c.l.b16 %v506
        %v1036 = vunpack.c.h.b16 %v506
        %v1037 = vunpack.c.l.b16 %v507
        %v1038 = vunpack.c.h.b16 %v507
        %v1039 = vunpack.c.l.b16 %v508
        %v1040 = vunpack.c.h.b16 %v508
        %v1041 = vunpack.c.l.b16 %v509
        %v1042 = vunpack.c.h.b16 %v509
        %v1043 = vunpack.c.l.b16 %v510
        %v1044 = vunpack.c.h.b16 %v510
        %v1045 = vunpack.c.l.b16 %v511
        %v1046 = vunpack.c.h.b16 %v511
        %v1047 = vunpack.c.l.b16 %v512
        %v1048 = vunpack.c.h.b16 %v512
        %v1049 = vunpack.c.l.b16 %v513
        %v1050 = vunpack.c.h.b16 %v513
        %v1051 = vunpack.c.l.b16 %v514
        %v1052 = vunpack.c.h.b16 %v514
        %v1053 = vunpack.c.l.b16 %v515
        %v1054 = vunpack.c.h.b16 %v515
        %v1055 = vunpack.c.l.b16 %v516
        %v1056 = vunpack.c.h.b16 %v516
        %v1057 = vunpack.c.l.b16 %v517
        %v1058 = vunpack.c.h.b16 %v517
        %v1059 = vunpack.c.l.b16 %v518
        %v1060 = vunpack.c.h.b16 %v518
        %v1061 = vunpack.c.l.b16 %v519
        %v1062 = vunpack.c.h.b16 %v519
        %v1063 = vunpack.c.l.b16 %v520
        %v1064 = vunpack.c.h.b16 %v520
        %v1065 = vpack.c.b16 %v813, %v809
        %v1066 = vpack.c.b16 %v814, %v810
        %v1067 = vpack.c.b16 %v815, %v811
        %v1068 = vpack.c.b16 %v816, %v812
        %v1069 = vpack.c.b16 %v821, %v817
        %v1070 = vpack.c.b16 %v822, %v818
        %v1071 = vpack.c.b16 %v823, %v819
        %v1072 = vpack.c.b16 %v824, %v820
        %v1073 = vpack.c.b16 %v829, %v825
        %v1074 = vpack.c.b16 %v830, %v826
        %v1075 = vpack.c.b16 %v831, %v827
        %v1076 = vpack.c.b16 %v832, %v828
        %v1077 = vpack.c.b16 %v837, %v833
        %v1078 = vpack.c.b16 %v838, %v834
        %v1079 = vpack.c.b16 %v839, %v835
        %v1080 = vpack.c.b16 %v840, %v836
        %v1081 = vpack.c.b16 %v845, %v841
        %v1082 = vpack.c.b16 %v846, %v842
        %v1083 = vpack.c.b16 %v847, %v843
        %v1084 = vpack.c.b16 %v848, %v844
        %v1085 = vpack.c.b16 %v853, %v849
        %v1086 = vpack.c.b16 %v854, %v850
        %v1087 = vpack.c.b16 %v855, %v851
        %v1088 = vpack.c.b16 %v856, %v852
        %v1089 = vpack.c.b16 %v861, %v857
        %v1090 = vpack.c.b16 %v862, %v858
        %v1091 = vpack.c.b16 %v863, %v859
        %v1092 = vpack.c.b16 %v864, %v860
        %v1093 = vpack.c.b16 %v869, %v865
        %v1094 = vpack.c.b16 %v870, %v866
        %v1095 = vpack.c.b16 %v871, %v867
        %v1096 = vpack.c.b16 %v872, %v868
        %v1097 = vpack.c.b16 %v877, %v873
        %v1098 = vpack.c.b16 %v878, %v874
        %v1099 = vpack.c.b16 %v879, %v875
        %v1100 = vpack.c.b16 %v880, %v876
        %v1101 = vpack.c.b16 %v885, %v881
        %v1102 = vpack.c.b16 %v886, %v882
        %v1103 = vpack.c.b16 %v887, %v883
        %v1104 = vpack.c.b16 %v888, %v884
        %v1105 = vpack.c.b16 %v893, %v889
        %v1106 = vpack.c.b16 %v894, %v890
        %v1107 = vpack.c.b16 %v895, %v891
        %v1108 = vpack.c.b16 %v896, %v892
        %v1109 = vpack.c.b16 %v901, %v897
        %v1110 = vpack.c.b16 %v902, %v898
        %v1111 = vpack.c.b16 %v903, %v899
        %v1112 = vpack.c.b16 %v904, %v900
        %v1113 = vpack.c.b16 %v909, %v905
        %v1114 = vpack.c.b16 %v910, %v906
        %v1115 = vpack.c.b16 %v911, %v907
        %v1116 = vpack.c.b16 %v912, %v908
        %v1117 = vpack.c.b16 %v917, %v913
        %v1118 = vpack.c.b16 %v918, %v914
        %v1119 = vpack.c.b16 %v919, %v915
        %v1120 = vpack.c.b16 %v920, %v916
        %v1121 = vpack.c.b16 %v925, %v921
        %v1122 = vpack.c.b16 %v926, %v922
        %v1123 = vpack.c.b16 %v927, %v923
        %v1124 = vpack.c.b16 %v928, %v924
        %v1125 = vpack.c.b16 %v933, %v929
        %v1126 = vpack.c.b16 %v934, %v930
        %v1127 = vpack.c.b16 %v935, %v931
        %v1128 = vpack.c.b16 %v936, %v932
        %v1129 = vpack.c.b16 %v941, %v937
        %v1130 = vpack.c.b16 %v942, %v938
        %v1131 = vpack.c.b16 %v943, %v939
        %v1132 = vpack.c.b16 %v944, %v940
        %v1133 = vpack.c.b16 %v949, %v945
        %v1134 = vpack.c.b16 %v950, %v946
        %v1135 = vpack.c.b16 %v951, %v947
        %v1136 = vpack.c.b16 %v952, %v948
        %v1137 = vpack.c.b16 %v957, %v953
        %v1138 = vpack.c.b16 %v958, %v954
        %v1139 = vpack.c.b16 %v959, %v955
        %v1140 = vpack.c.b16 %v960, %v956
        %v1141 = vpack.c.b16 %v965, %v961
        %v1142 = vpack.c.b16 %v966, %v962
        %v1143 = vpack.c.b16 %v967, %v963
        %v1144 = vpack.c.b16 %v968, %v964
        %v1145 = vpack.c.b16 %v973, %v969
        %v1146 = vpack.c.b16 %v974, %v970
        %v1147 = vpack.c.b16 %v975, %v971
        %v1148 = vpack.c.b16 %v976, %v972
        %v1149 = vpack.c.b16 %v981, %v977
        %v1150 = vpack.c.b16 %v982, %v978
        %v1151 = vpack.c.b16 %v983, %v979
        %v1152 = vpack.c.b16 %v984, %v980
        %v1153 = vpack.c.b16 %v989, %v985
        %v1154 = vpack.c.b16 %v990, %v986
        %v1155 = vpack.c.b16 %v991, %v987
        %v1156 = vpack.c.b16 %v992, %v988
        %v1157 = vpack.c.b16 %v997, %v993
        %v1158 = vpack.c.b16 %v998, %v994
        %v1159 = vpack.c.b16 %v999, %v995
        %v1160 = vpack.c.b16 %v1000, %v996
        %v1161 = vpack.c.b16 %v1005, %v1001
        %v1162 = vpack.c.b16 %v1006, %v1002
        %v1163 = vpack.c.b16 %v1007, %v1003
        %v1164 = vpack.c.b16 %v1008, %v1004
        %v1165 = vpack.c.b16 %v1013, %v1009
        %v1166 = vpack.c.b16 %v1014, %v1010
        %v1167 = vpack.c.b16 %v1015, %v1011
        %v1168 = vpack.c.b16 %v1016, %v1012
        %v1169 = vpack.c.b16 %v1021, %v1017
        %v1170 = vpack.c.b16 %v1022, %v1018
        %v1171 = vpack.c.b16 %v1023, %v1019
        %v1172 = vpack.c.b16 %v1024, %v1020
        %v1173 = vpack.c.b16 %v1029, %v1025
        %v1174 = vpack.c.b16 %v1030, %v1026
        %v1175 = vpack.c.b16 %v1031, %v1027
        %v1176 = vpack.c.b16 %v1032, %v1028
        %v1177 = vpack.c.b16 %v1037, %v1033
        %v1178 = vpack.c.b16 %v1038, %v1034
        %v1179 = vpack.c.b16 %v1039, %v1035
        %v1180 = vpack.c.b16 %v1040, %v1036
        %v1181 = vpack.c.b16 %v1045, %v1041
        %v1182 = vpack.c.b16 %v1046, %v1042
        %v1183 = vpack.c.b16 %v1047, %v1043
        %v1184 = vpack.c.b16 %v1048, %v1044
        %v1185 = vpack.c.b16 %v1053, %v1049
        %v1186 = vpack.c.b16 %v1054, %v1050
        %v1187 = vpack.c.b16 %v1055, %v1051
        %v1188 = vpack.c.b16 %v1056, %v1052
        %v1189 = vpack.c.b16 %v1061, %v1057
        %v1190 = vpack.c.b16 %v1062, %v1058
        %v1191 = vpack.c.b16 %v1063, %v1059
        %v1192 = vpack.c.b16 %v1064, %v1060
        %1321 = vmatprep.subr.bf16.mxu0 %v1066
        %1322 = vmatpush1.bf16.msra.mxu0 %v1065
        %1323 = vmatprep.subr.bf16.mxu0 %v1070
        %1324 = vmatpush1.bf16.msra.mxu0 %v1069
        %1325 = vmatprep.subr.bf16.mxu0 %v1074
        %1326 = vmatpush1.bf16.msra.mxu0 %v1073
        %1327 = vmatprep.subr.bf16.mxu0 %v1078
        %1328 = vmatpush1.bf16.msra.mxu0 %v1077
        %1329 = vmatprep.subr.bf16.mxu0 %v1082
        %1330 = vmatpush1.bf16.msra.mxu0 %v1081
        %1331 = vmatprep.subr.bf16.mxu0 %v1086
        %1332 = vmatpush1.bf16.msra.mxu0 %v1085
        %1333 = vmatprep.subr.bf16.mxu0 %v1090
        %1334 = vmatpush1.bf16.msra.mxu0 %v1089
        %1335 = vmatprep.subr.bf16.mxu0 %v1094
        %1336 = vmatpush1.bf16.msra.mxu0 %v1093
        %1337 = vmatprep.subr.bf16.mxu0 %v1098
        %1338 = vmatpush1.bf16.msra.mxu0 %v1097
        %1339 = vmatprep.subr.bf16.mxu0 %v1102
        %1340 = vmatpush1.bf16.msra.mxu0 %v1101
        %1341 = vmatprep.subr.bf16.mxu0 %v1106
        %1342 = vmatpush1.bf16.msra.mxu0 %v1105
        %1343 = vmatprep.subr.bf16.mxu0 %v1110
        %1344 = vmatpush1.bf16.msra.mxu0 %v1109
        %1345 = vmatprep.subr.bf16.mxu0 %v1114
        %1346 = vmatpush1.bf16.msra.mxu0 %v1113
        %1347 = vmatprep.subr.bf16.mxu0 %v1118
        %1348 = vmatpush1.bf16.msra.mxu0 %v1117
        %1349 = vmatprep.subr.bf16.mxu0 %v1122
        %1350 = vmatpush1.bf16.msra.mxu0 %v1121
        %1351 = vmatprep.subr.bf16.mxu0 %v1126
        %1352 = vmatpush1.bf16.msra.mxu0 %v1125
        %1353 = vmatprep.mubr.bf16.mxu0 %v618
        %1354 = vmatmul.mubr.bf16.gmra.mrb[0].mxu0 %v617
        %v1355 = vpop.f32.mrb[0].mxu0
        %v1356 = vadd.f32 0.0, %v1355
        %v1357 = vpop.f32.mrb[0].mxu0
        %v1358 = vadd.f32 0.0, %v1357
        %v1359 = vpop.f32.mrb[0].mxu0
        %v1360 = vadd.f32 0.0, %v1359
        %v1361 = vpop.f32.mrb[0].mxu0
        %v1362 = vadd.f32 0.0, %v1361
        %1363 = vmatprep.mubr.bf16.mxu0 %v622
        %1364 = vmatmul.mubr.bf16.gmra.mrb[0].mxu0 %v621
        %v1365 = vpop.f32.mrb[0].mxu0
        %v1366 = vadd.f32 0.0, %v1365
        %v1367 = vpop.f32.mrb[0].mxu0
        %v1368 = vadd.f32 0.0, %v1367
        %v1369 = vpop.f32.mrb[0].mxu0
        %v1370 = vadd.f32 0.0, %v1369
        %v1371 = vpop.f32.mrb[0].mxu0
        %v1372 = vadd.f32 0.0, %v1371
        %1373 = vmatprep.mubr.bf16.mxu0 %v626
        %1374 = vmatmul.mubr.bf16.gmra.mrb[0].mxu0 %v625
        %v1375 = vpop.f32.mrb[0].mxu0
        %v1376 = vadd.f32 0.0, %v1375
        %v1377 = vpop.f32.mrb[0].mxu0
        %v1378 = vadd.f32 0.0, %v1377
        %v1379 = vpop.f32.mrb[0].mxu0
        %v1380 = vadd.f32 0.0, %v1379
        %v1381 = vpop.f32.mrb[0].mxu0
        %v1382 = vadd.f32 0.0, %v1381
        %1383 = vmatprep.mubr.bf16.mxu0 %v630
        %1384 = vmatmul.mubr.bf16.gmra.mrb[0].mxu0 %v629
        %v1385 = vpop.f32.mrb[0].mxu0
        %v1386 = vadd.f32 0.0, %v1385
        %v1387 = vpop.f32.mrb[0].mxu0
        %v1388 = vadd.f32 0.0, %v1387
        %v1389 = vpop.f32.mrb[0].mxu0
        %v1390 = vadd.f32 0.0, %v1389
        %v1391 = vpop.f32.mrb[0].mxu0
        %v1392 = vadd.f32 0.0, %v1391
        %1393 = vmatprep.mubr.bf16.mxu0 %v634
        %1394 = vmatmul.mubr.bf16.gmra.mrb[0].mxu0 %v633
        %v1395 = vpop.f32.mrb[0].mxu0
        %v1396 = vadd.f32 0.0, %v1395
        %v1397 = vpop.f32.mrb[0].mxu0
        %v1398 = vadd.f32 0.0, %v1397
        %v1399 = vpop.f32.mrb[0].mxu0
        %v1400 = vadd.f32 0.0, %v1399
        %v1401 = vpop.f32.mrb[0].mxu0
        %v1402 = vadd.f32 0.0, %v1401
        %1403 = vmatprep.mubr.bf16.mxu0 %v638
        %1404 = vmatmul.mubr.bf16.gmra.mrb[0].mxu0 %v637
        %v1405 = vpop.f32.mrb[0].mxu0
        %v1406 = vadd.f32 0.0, %v1405
        %v1407 = vpop.f32.mrb[0].mxu0
        %v1408 = vadd.f32 0.0, %v1407
        %v1409 = vpop.f32.mrb[0].mxu0
        %v1410 = vadd.f32 0.0, %v1409
        %v1411 = vpop.f32.mrb[0].mxu0
        %v1412 = vadd.f32 0.0, %v1411
        %1413 = vmatprep.mubr.bf16.mxu0 %v642
        %1414 = vmatmul.mubr.bf16.gmra.mrb[0].mxu0 %v641
        %v1415 = vpop.f32.mrb[0].mxu0
        %v1416 = vadd.f32 0.0, %v1415
        %v1417 = vpop.f32.mrb[0].mxu0
        %v1418 = vadd.f32 0.0, %v1417
        %v1419 = vpop.f32.mrb[0].mxu0
        %v1420 = vadd.f32 0.0, %v1419
        %v1421 = vpop.f32.mrb[0].mxu0
        %v1422 = vadd.f32 0.0, %v1421
        %1423 = vmatprep.mubr.bf16.mxu0 %v646
        %1424 = vmatmul.mubr.bf16.gmra.mrb[0].mxu0 %v645
        %v1425 = vpop.f32.mrb[0].mxu0
        %v1426 = vadd.f32 0.0, %v1425
        %v1427 = vpop.f32.mrb[0].mxu0
        %v1428 = vadd.f32 0.0, %v1427
        %v1429 = vpop.f32.mrb[0].mxu0
        %v1430 = vadd.f32 0.0, %v1429
        %v1431 = vpop.f32.mrb[0].mxu0
        %v1432 = vadd.f32 0.0, %v1431
        %1433 = vdwg.mxu0
        %1434 = vmatprep.subr.bf16.mxu0 %v1130
        %1435 = vmatpush1.bf16.msra.mxu0 %v1129
        %1436 = vmatprep.subr.bf16.mxu0 %v1134
        %1437 = vmatpush1.bf16.msra.mxu0 %v1133
        %1438 = vmatprep.subr.bf16.mxu0 %v1138
        %1439 = vmatpush1.bf16.msra.mxu0 %v1137
        %1440 = vmatprep.subr.bf16.mxu0 %v1142
        %1441 = vmatpush1.bf16.msra.mxu0 %v1141
        %1442 = vmatprep.subr.bf16.mxu0 %v1146
        %1443 = vmatpush1.bf16.msra.mxu0 %v1145
        %1444 = vmatprep.subr.bf16.mxu0 %v1150
        %1445 = vmatpush1.bf16.msra.mxu0 %v1149
        %1446 = vmatprep.subr.bf16.mxu0 %v1154
        %1447 = vmatpush1.bf16.msra.mxu0 %v1153
        %1448 = vmatprep.subr.bf16.mxu0 %v1158
        %1449 = vmatpush1.bf16.msra.mxu0 %v1157
        %1450 = vmatprep.subr.bf16.mxu0 %v1162
        %1451 = vmatpush1.bf16.msra.mxu0 %v1161
        %1452 = vmatprep.subr.bf16.mxu0 %v1166
        %1453 = vmatpush1.bf16.msra.mxu0 %v1165
        %1454 = vmatprep.subr.bf16.mxu0 %v1170
        %1455 = vmatpush1.bf16.msra.mxu0 %v1169
        %1456 = vmatprep.subr.bf16.mxu0 %v1174
        %1457 = vmatpush1.bf16.msra.mxu0 %v1173
        %1458 = vmatprep.subr.bf16.mxu0 %v1178
        %1459 = vmatpush1.bf16.msra.mxu0 %v1177
        %1460 = vmatprep.subr.bf16.mxu0 %v1182
        %1461 = vmatpush1.bf16.msra.mxu0 %v1181
        %1462 = vmatprep.subr.bf16.mxu0 %v1186
        %1463 = vmatpush1.bf16.msra.mxu0 %v1185
        %1464 = vmatprep.subr.bf16.mxu0 %v1190
        %1465 = vmatpush1.bf16.msra.mxu0 %v1189
        %1466 = vmatprep.mubr.bf16.mxu0 %v620
        %1467 = vmatmul.mubr.bf16.gmra.mrb[0].mxu0 %v619
        %v1468 = vpop.f32.mrb[0].mxu0
        %v1469 = vadd.f32 %v1356, %v1468
        %v1470 = vpop.f32.mrb[0].mxu0
        %v1471 = vadd.f32 %v1358, %v1470
        %v1472 = vpop.f32.mrb[0].mxu0
        %v1473 = vadd.f32 %v1360, %v1472
        %v1474 = vpop.f32.mrb[0].mxu0
        %v1475 = vadd.f32 %v1362, %v1474
        %1476 = vmatprep.mubr.bf16.mxu0 %v624
        %1477 = vmatmul.mubr.bf16.gmra.mrb[0].mxu0 %v623
        %v1478 = vpop.f32.mrb[0].mxu0
        %v1479 = vadd.f32 %v1366, %v1478
        %v1480 = vpop.f32.mrb[0].mxu0
        %v1481 = vadd.f32 %v1368, %v1480
        %v1482 = vpop.f32.mrb[0].mxu0
        %v1483 = vadd.f32 %v1370, %v1482
        %v1484 = vpop.f32.mrb[0].mxu0
        %v1485 = vadd.f32 %v1372, %v1484
        %1486 = vmatprep.mubr.bf16.mxu0 %v628
        %1487 = vmatmul.mubr.bf16.gmra.mrb[0].mxu0 %v627
        %v1488 = vpop.f32.mrb[0].mxu0
        %v1489 = vadd.f32 %v1376, %v1488
        %v1490 = vpop.f32.mrb[0].mxu0
        %v1491 = vadd.f32 %v1378, %v1490
        %v1492 = vpop.f32.mrb[0].mxu0
        %v1493 = vadd.f32 %v1380, %v1492
        %v1494 = vpop.f32.mrb[0].mxu0
        %v1495 = vadd.f32 %v1382, %v1494
        %1496 = vmatprep.mubr.bf16.mxu0 %v632
        %1497 = vmatmul.mubr.bf16.gmra.mrb[0].mxu0 %v631
        %v1498 = vpop.f32.mrb[0].mxu0
        %v1499 = vadd.f32 %v1386, %v1498
        %v1500 = vpop.f32.mrb[0].mxu0
        %v1501 = vadd.f32 %v1388, %v1500
        %v1502 = vpop.f32.mrb[0].mxu0
        %v1503 = vadd.f32 %v1390, %v1502
        %v1504 = vpop.f32.mrb[0].mxu0
        %v1505 = vadd.f32 %v1392, %v1504
        %1506 = vmatprep.mubr.bf16.mxu0 %v636
        %1507 = vmatmul.mubr.bf16.gmra.mrb[0].mxu0 %v635
        %v1508 = vpop.f32.mrb[0].mxu0
        %v1509 = vadd.f32 %v1396, %v1508
        %v1510 = vpop.f32.mrb[0].mxu0
        %v1511 = vadd.f32 %v1398, %v1510
        %v1512 = vpop.f32.mrb[0].mxu0
        %v1513 = vadd.f32 %v1400, %v1512
        %v1514 = vpop.f32.mrb[0].mxu0
        %v1515 = vadd.f32 %v1402, %v1514
        %1516 = vmatprep.mubr.bf16.mxu0 %v640
        %1517 = vmatmul.mubr.bf16.gmra.mrb[0].mxu0 %v639
        %v1518 = vpop.f32.mrb[0].mxu0
        %v1519 = vadd.f32 %v1406, %v1518
        %v1520 = vpop.f32.mrb[0].mxu0
        %v1521 = vadd.f32 %v1408, %v1520
        %v1522 = vpop.f32.mrb[0].mxu0
        %v1523 = vadd.f32 %v1410, %v1522
        %v1524 = vpop.f32.mrb[0].mxu0
        %v1525 = vadd.f32 %v1412, %v1524
        %1526 = vmatprep.mubr.bf16.mxu0 %v644
        %1527 = vmatmul.mubr.bf16.gmra.mrb[0].mxu0 %v643
        %v1528 = vpop.f32.mrb[0].mxu0
        %v1529 = vadd.f32 %v1416, %v1528
        %v1530 = vpop.f32.mrb[0].mxu0
        %v1531 = vadd.f32 %v1418, %v1530
        %v1532 = vpop.f32.mrb[0].mxu0
        %v1533 = vadd.f32 %v1420, %v1532
        %v1534 = vpop.f32.mrb[0].mxu0
        %v1535 = vadd.f32 %v1422, %v1534
        %1536 = vmatprep.mubr.bf16.mxu0 %v648
        %1537 = vmatmul.mubr.bf16.gmra.mrb[0].mxu0 %v647
        %v1538 = vpop.f32.mrb[0].mxu0
        %v1539 = vadd.f32 %v1426, %v1538
        %v1540 = vpop.f32.mrb[0].mxu0
        %v1541 = vadd.f32 %v1428, %v1540
        %v1542 = vpop.f32.mrb[0].mxu0
        %v1543 = vadd.f32 %v1430, %v1542
        %v1544 = vpop.f32.mrb[0].mxu0
        %v1545 = vadd.f32 %v1432, %v1544
        %1546 = vdwg.mxu0
        %1547 = vmatprep.subr.bf16.mxu0 %v1068
        %1548 = vmatpush1.bf16.msra.mxu0 %v1067
        %1549 = vmatprep.subr.bf16.mxu0 %v1072
        %1550 = vmatpush1.bf16.msra.mxu0 %v1071
        %1551 = vmatprep.subr.bf16.mxu0 %v1076
        %1552 = vmatpush1.bf16.msra.mxu0 %v1075
        %1553 = vmatprep.subr.bf16.mxu0 %v1080
        %1554 = vmatpush1.bf16.msra.mxu0 %v1079
        %1555 = vmatprep.subr.bf16.mxu0 %v1084
        %1556 = vmatpush1.bf16.msra.mxu0 %v1083
        %1557 = vmatprep.subr.bf16.mxu0 %v1088
        %1558 = vmatpush1.bf16.msra.mxu0 %v1087
        %1559 = vmatprep.subr.bf16.mxu0 %v1092
        %1560 = vmatpush1.bf16.msra.mxu0 %v1091
        %1561 = vmatprep.subr.bf16.mxu0 %v1096
        %1562 = vmatpush1.bf16.msra.mxu0 %v1095
        %1563 = vmatprep.subr.bf16.mxu0 %v1100
        %1564 = vmatpush1.bf16.msra.mxu0 %v1099
        %1565 = vmatprep.subr.bf16.mxu0 %v1104
        %1566 = vmatpush1.bf16.msra.mxu0 %v1103
        %1567 = vmatprep.subr.bf16.mxu0 %v1108
        %1568 = vmatpush1.bf16.msra.mxu0 %v1107
        %1569 = vmatprep.subr.bf16.mxu0 %v1112
        %1570 = vmatpush1.bf16.msra.mxu0 %v1111
        %1571 = vmatprep.subr.bf16.mxu0 %v1116
        %1572 = vmatpush1.bf16.msra.mxu0 %v1115
        %1573 = vmatprep.subr.bf16.mxu0 %v1120
        %1574 = vmatpush1.bf16.msra.mxu0 %v1119
        %1575 = vmatprep.subr.bf16.mxu0 %v1124
        %1576 = vmatpush1.bf16.msra.mxu0 %v1123
        %1577 = vmatprep.subr.bf16.mxu0 %v1128
        %1578 = vmatpush1.bf16.msra.mxu0 %v1127
        %1579 = vmatprep.mubr.bf16.mxu0 %v618
        %1580 = vmatmul.mubr.bf16.gmra.mrb[0].mxu0 %v617
        %v1581 = vpop.f32.mrb[0].mxu0
        %v1582 = vadd.f32 0.0, %v1581
        %v1583 = vpop.f32.mrb[0].mxu0
        %v1584 = vadd.f32 0.0, %v1583
        %v1585 = vpop.f32.mrb[0].mxu0
        %v1586 = vadd.f32 0.0, %v1585
        %v1587 = vpop.f32.mrb[0].mxu0
        %v1588 = vadd.f32 0.0, %v1587
        %1589 = vmatprep.mubr.bf16.mxu0 %v622
        %1590 = vmatmul.mubr.bf16.gmra.mrb[0].mxu0 %v621
        %v1591 = vpop.f32.mrb[0].mxu0
        %v1592 = vadd.f32 0.0, %v1591
        %v1593 = vpop.f32.mrb[0].mxu0
        %v1594 = vadd.f32 0.0, %v1593
        %v1595 = vpop.f32.mrb[0].mxu0
        %v1596 = vadd.f32 0.0, %v1595
        %v1597 = vpop.f32.mrb[0].mxu0
        %v1598 = vadd.f32 0.0, %v1597
        %1599 = vmatprep.mubr.bf16.mxu0 %v626
        %1600 = vmatmul.mubr.bf16.gmra.mrb[0].mxu0 %v625
        %v1601 = vpop.f32.mrb[0].mxu0
        %v1602 = vadd.f32 0.0, %v1601
        %v1603 = vpop.f32.mrb[0].mxu0
        %v1604 = vadd.f32 0.0, %v1603
        %v1605 = vpop.f32.mrb[0].mxu0
        %v1606 = vadd.f32 0.0, %v1605
        %v1607 = vpop.f32.mrb[0].mxu0
        %v1608 = vadd.f32 0.0, %v1607
        %1609 = vmatprep.mubr.bf16.mxu0 %v630
        %1610 = vmatmul.mubr.bf16.gmra.mrb[0].mxu0 %v629
        %v1611 = vpop.f32.mrb[0].mxu0
        %v1612 = vadd.f32 0.0, %v1611
        %v1613 = vpop.f32.mrb[0].mxu0
        %v1614 = vadd.f32 0.0, %v1613
        %v1615 = vpop.f32.mrb[0].mxu0
        %v1616 = vadd.f32 0.0, %v1615
        %v1617 = vpop.f32.mrb[0].mxu0
        %v1618 = vadd.f32 0.0, %v1617
        %1619 = vmatprep.mubr.bf16.mxu0 %v634
        %1620 = vmatmul.mubr.bf16.gmra.mrb[0].mxu0 %v633
        %v1621 = vpop.f32.mrb[0].mxu0
        %v1622 = vadd.f32 0.0, %v1621
        %v1623 = vpop.f32.mrb[0].mxu0
        %v1624 = vadd.f32 0.0, %v1623
        %v1625 = vpop.f32.mrb[0].mxu0
        %v1626 = vadd.f32 0.0, %v1625
        %v1627 = vpop.f32.mrb[0].mxu0
        %v1628 = vadd.f32 0.0, %v1627
        %1629 = vmatprep.mubr.bf16.mxu0 %v638
        %1630 = vmatmul.mubr.bf16.gmra.mrb[0].mxu0 %v637
        %v1631 = vpop.f32.mrb[0].mxu0
        %v1632 = vadd.f32 0.0, %v1631
        %v1633 = vpop.f32.mrb[0].mxu0
        %v1634 = vadd.f32 0.0, %v1633
        %v1635 = vpop.f32.mrb[0].mxu0
        %v1636 = vadd.f32 0.0, %v1635
        %v1637 = vpop.f32.mrb[0].mxu0
        %v1638 = vadd.f32 0.0, %v1637
        %1639 = vmatprep.mubr.bf16.mxu0 %v642
        %1640 = vmatmul.mubr.bf16.gmra.mrb[0].mxu0 %v641
        %v1641 = vpop.f32.mrb[0].mxu0
        %v1642 = vadd.f32 0.0, %v1641
        %v1643 = vpop.f32.mrb[0].mxu0
        %v1644 = vadd.f32 0.0, %v1643
        %v1645 = vpop.f32.mrb[0].mxu0
        %v1646 = vadd.f32 0.0, %v1645
        %v1647 = vpop.f32.mrb[0].mxu0
        %v1648 = vadd.f32 0.0, %v1647
        %1649 = vmatprep.mubr.bf16.mxu0 %v646
        %1650 = vmatmul.mubr.bf16.gmra.mrb[0].mxu0 %v645
        %v1651 = vpop.f32.mrb[0].mxu0
        %v1652 = vadd.f32 0.0, %v1651
        %v1653 = vpop.f32.mrb[0].mxu0
        %v1654 = vadd.f32 0.0, %v1653
        %v1655 = vpop.f32.mrb[0].mxu0
        %v1656 = vadd.f32 0.0, %v1655
        %v1657 = vpop.f32.mrb[0].mxu0
        %v1658 = vadd.f32 0.0, %v1657
        %1659 = vdwg.mxu0
        %1660 = vmatprep.subr.bf16.mxu0 %v1132
        %1661 = vmatpush1.bf16.msra.mxu0 %v1131
        %1662 = vmatprep.subr.bf16.mxu0 %v1136
        %1663 = vmatpush1.bf16.msra.mxu0 %v1135
        %1664 = vmatprep.subr.bf16.mxu0 %v1140
        %1665 = vmatpush1.bf16.msra.mxu0 %v1139
        %1666 = vmatprep.subr.bf16.mxu0 %v1144
        %1667 = vmatpush1.bf16.msra.mxu0 %v1143
        %1668 = vmatprep.subr.bf16.mxu0 %v1148
        %1669 = vmatpush1.bf16.msra.mxu0 %v1147
        %1670 = vmatprep.subr.bf16.mxu0 %v1152
        %1671 = vmatpush1.bf16.msra.mxu0 %v1151
        %1672 = vmatprep.subr.bf16.mxu0 %v1156
        %1673 = vmatpush1.bf16.msra.mxu0 %v1155
        %1674 = vmatprep.subr.bf16.mxu0 %v1160
        %1675 = vmatpush1.bf16.msra.mxu0 %v1159
        %1676 = vmatprep.subr.bf16.mxu0 %v1164
        %1677 = vmatpush1.bf16.msra.mxu0 %v1163
        %1678 = vmatprep.subr.bf16.mxu0 %v1168
        %1679 = vmatpush1.bf16.msra.mxu0 %v1167
        %1680 = vmatprep.subr.bf16.mxu0 %v1172
        %1681 = vmatpush1.bf16.msra.mxu0 %v1171
        %1682 = vmatprep.subr.bf16.mxu0 %v1176
        %1683 = vmatpush1.bf16.msra.mxu0 %v1175
        %1684 = vmatprep.subr.bf16.mxu0 %v1180
        %1685 = vmatpush1.bf16.msra.mxu0 %v1179
        %1686 = vmatprep.subr.bf16.mxu0 %v1184
        %1687 = vmatpush1.bf16.msra.mxu0 %v1183
        %1688 = vmatprep.subr.bf16.mxu0 %v1188
        %1689 = vmatpush1.bf16.msra.mxu0 %v1187
        %1690 = vmatprep.subr.bf16.mxu0 %v1192
        %1691 = vmatpush1.bf16.msra.mxu0 %v1191
        %1692 = vmatprep.mubr.bf16.mxu0 %v620
        %1693 = vmatmul.mubr.bf16.gmra.mrb[0].mxu0 %v619
        %v1694 = vpop.f32.mrb[0].mxu0
        %v1695 = vadd.f32 %v1582, %v1694
        %v1696 = vpop.f32.mrb[0].mxu0
        %v1697 = vadd.f32 %v1584, %v1696
        %v1698 = vpop.f32.mrb[0].mxu0
        %v1699 = vadd.f32 %v1586, %v1698
        %v1700 = vpop.f32.mrb[0].mxu0
        %v1701 = vadd.f32 %v1588, %v1700
        %1702 = vmatprep.mubr.bf16.mxu0 %v624
        %1703 = vmatmul.mubr.bf16.gmra.mrb[0].mxu0 %v623
        %v1704 = vpop.f32.mrb[0].mxu0
        %v1705 = vadd.f32 %v1592, %v1704
        %v1706 = vpop.f32.mrb[0].mxu0
        %v1707 = vadd.f32 %v1594, %v1706
        %v1708 = vpop.f32.mrb[0].mxu0
        %v1709 = vadd.f32 %v1596, %v1708
        %v1710 = vpop.f32.mrb[0].mxu0
        %v1711 = vadd.f32 %v1598, %v1710
        %1712 = vmatprep.mubr.bf16.mxu0 %v628
        %1713 = vmatmul.mubr.bf16.gmra.mrb[0].mxu0 %v627
        %v1714 = vpop.f32.mrb[0].mxu0
        %v1715 = vadd.f32 %v1602, %v1714
        %v1716 = vpop.f32.mrb[0].mxu0
        %v1717 = vadd.f32 %v1604, %v1716
        %v1718 = vpop.f32.mrb[0].mxu0
        %v1719 = vadd.f32 %v1606, %v1718
        %v1720 = vpop.f32.mrb[0].mxu0
        %v1721 = vadd.f32 %v1608, %v1720
        %1722 = vmatprep.mubr.bf16.mxu0 %v632
        %1723 = vmatmul.mubr.bf16.gmra.mrb[0].mxu0 %v631
        %v1724 = vpop.f32.mrb[0].mxu0
        %v1725 = vadd.f32 %v1612, %v1724
        %v1726 = vpop.f32.mrb[0].mxu0
        %v1727 = vadd.f32 %v1614, %v1726
        %v1728 = vpop.f32.mrb[0].mxu0
        %v1729 = vadd.f32 %v1616, %v1728
        %v1730 = vpop.f32.mrb[0].mxu0
        %v1731 = vadd.f32 %v1618, %v1730
        %1732 = vmatprep.mubr.bf16.mxu0 %v636
        %1733 = vmatmul.mubr.bf16.gmra.mrb[0].mxu0 %v635
        %v1734 = vpop.f32.mrb[0].mxu0
        %v1735 = vadd.f32 %v1622, %v1734
        %v1736 = vpop.f32.mrb[0].mxu0
        %v1737 = vadd.f32 %v1624, %v1736
        %v1738 = vpop.f32.mrb[0].mxu0
        %v1739 = vadd.f32 %v1626, %v1738
        %v1740 = vpop.f32.mrb[0].mxu0
        %v1741 = vadd.f32 %v1628, %v1740
        %1742 = vmatprep.mubr.bf16.mxu0 %v640
        %1743 = vmatmul.mubr.bf16.gmra.mrb[0].mxu0 %v639
        %v1744 = vpop.f32.mrb[0].mxu0
        %v1745 = vadd.f32 %v1632, %v1744
        %v1746 = vpop.f32.mrb[0].mxu0
        %v1747 = vadd.f32 %v1634, %v1746
        %v1748 = vpop.f32.mrb[0].mxu0
        %v1749 = vadd.f32 %v1636, %v1748
        %v1750 = vpop.f32.mrb[0].mxu0
        %v1751 = vadd.f32 %v1638, %v1750
        %1752 = vmatprep.mubr.bf16.mxu0 %v644
        %1753 = vmatmul.mubr.bf16.gmra.mrb[0].mxu0 %v643
        %v1754 = vpop.f32.mrb[0].mxu0
        %v1755 = vadd.f32 %v1642, %v1754
        %v1756 = vpop.f32.mrb[0].mxu0
        %v1757 = vadd.f32 %v1644, %v1756
        %v1758 = vpop.f32.mrb[0].mxu0
        %v1759 = vadd.f32 %v1646, %v1758
        %v1760 = vpop.f32.mrb[0].mxu0
        %v1761 = vadd.f32 %v1648, %v1760
        %1762 = vmatprep.mubr.bf16.mxu0 %v648
        %1763 = vmatmul.mubr.bf16.gmra.mrb[0].mxu0 %v647
        %v1764 = vpop.f32.mrb[0].mxu0
        %v1765 = vadd.f32 %v1652, %v1764
        %v1766 = vpop.f32.mrb[0].mxu0
        %v1767 = vadd.f32 %v1654, %v1766
        %v1768 = vpop.f32.mrb[0].mxu0
        %v1769 = vadd.f32 %v1656, %v1768
        %v1770 = vpop.f32.mrb[0].mxu0
        %v1771 = vadd.f32 %v1658, %v1770
        %1772 = vdwg.mxu0
        %v1773 = vadd.f32 %v297, %v1469
        %v1774 = vadd.f32 %v298, %v1471
        %v1775 = vadd.f32 %v299, %v1695
        %v1776 = vadd.f32 %v300, %v1697
        %v1777 = vadd.f32 %v301, %v1473
        %v1778 = vadd.f32 %v302, %v1475
        %v1779 = vadd.f32 %v303, %v1699
        %v1780 = vadd.f32 %v304, %v1701
        %v1781 = vadd.f32 %v305, %v1479
        %v1782 = vadd.f32 %v306, %v1481
        %v1783 = vadd.f32 %v307, %v1705
        %v1784 = vadd.f32 %v308, %v1707
        %v1785 = vadd.f32 %v309, %v1483
        %v1786 = vadd.f32 %v310, %v1485
        %v1787 = vadd.f32 %v311, %v1709
        %v1788 = vadd.f32 %v312, %v1711
        %v1789 = vadd.f32 %v313, %v1489
        %v1790 = vadd.f32 %v314, %v1491
        %v1791 = vadd.f32 %v315, %v1715
        %v1792 = vadd.f32 %v316, %v1717
        %v1793 = vadd.f32 %v317, %v1493
        %v1794 = vadd.f32 %v318, %v1495
        %v1795 = vadd.f32 %v319, %v1719
        %v1796 = vadd.f32 %v320, %v1721
        %v1797 = vadd.f32 %v321, %v1499
        %v1798 = vadd.f32 %v322, %v1501
        %v1799 = vadd.f32 %v323, %v1725
        %v1800 = vadd.f32 %v324, %v1727
        %v1801 = vadd.f32 %v325, %v1503
        %v1802 = vadd.f32 %v326, %v1505
        %v1803 = vadd.f32 %v327, %v1729
        %v1804 = vadd.f32 %v328, %v1731
        %v1805 = vadd.f32 %v329, %v1509
        %v1806 = vadd.f32 %v330, %v1511
        %v1807 = vadd.f32 %v331, %v1735
        %v1808 = vadd.f32 %v332, %v1737
        %v1809 = vadd.f32 %v333, %v1513
        %v1810 = vadd.f32 %v334, %v1515
        %v1811 = vadd.f32 %v335, %v1739
        %v1812 = vadd.f32 %v336, %v1741
        %v1813 = vadd.f32 %v337, %v1519
        %v1814 = vadd.f32 %v338, %v1521
        %v1815 = vadd.f32 %v339, %v1745
        %v1816 = vadd.f32 %v340, %v1747
        %v1817 = vadd.f32 %v341, %v1523
        %v1818 = vadd.f32 %v342, %v1525
        %v1819 = vadd.f32 %v343, %v1749
        %v1820 = vadd.f32 %v344, %v1751
        %v1821 = vadd.f32 %v345, %v1529
        %v1822 = vadd.f32 %v346, %v1531
        %v1823 = vadd.f32 %v347, %v1755
        %v1824 = vadd.f32 %v348, %v1757
        %v1825 = vadd.f32 %v349, %v1533
        %v1826 = vadd.f32 %v350, %v1535
        %v1827 = vadd.f32 %v351, %v1759
        %v1828 = vadd.f32 %v352, %v1761
        %v1829 = vadd.f32 %v353, %v1539
        %v1830 = vadd.f32 %v354, %v1541
        %v1831 = vadd.f32 %v355, %v1765
        %v1832 = vadd.f32 %v356, %v1767
        %v1833 = vadd.f32 %v357, %v1543
        %v1834 = vadd.f32 %v358, %v1545
        %v1835 = vadd.f32 %v359, %v1769
        %v1836 = vadd.f32 %v360, %v1771
        %1837 = vst [vmem:[#allocation2] sm:$0xff] %v1773
        %1838 = vst [vmem:[#allocation2 + $0x8] sm:$0xff] %v1774
        %1839 = vst [vmem:[#allocation2 + $0x10] sm:$0xff] %v1775
        %1840 = vst [vmem:[#allocation2 + $0x18] sm:$0xff] %v1776
        %1841 = vst [vmem:[#allocation2 + $0x20] sm:$0xff] %v1777
        %1842 = vst [vmem:[#allocation2 + $0x28] sm:$0xff] %v1778
        %1843 = vst [vmem:[#allocation2 + $0x30] sm:$0xff] %v1779
        %1844 = vst [vmem:[#allocation2 + $0x38] sm:$0xff] %v1780
        %1845 = vst [vmem:[#allocation2 + $0x40] sm:$0xff] %v1781
        %1846 = vst [vmem:[#allocation2 + $0x48] sm:$0xff] %v1782
        %1847 = vst [vmem:[#allocation2 + $0x50] sm:$0xff] %v1783
        %1848 = vst [vmem:[#allocation2 + $0x58] sm:$0xff] %v1784
        %1849 = vst [vmem:[#allocation2 + $0x60] sm:$0xff] %v1785
        %1850 = vst [vmem:[#allocation2 + $0x68] sm:$0xff] %v1786
        %1851 = vst [vmem:[#allocation2 + $0x70] sm:$0xff] %v1787
        %1852 = vst [vmem:[#allocation2 + $0x78] sm:$0xff] %v1788
        %1853 = vst [vmem:[#allocation2 + $0x80] sm:$0xff] %v1789
        %1854 = vst [vmem:[#allocation2 + $0x88] sm:$0xff] %v1790
        %1855 = vst [vmem:[#allocation2 + $0x90] sm:$0xff] %v1791
        %1856 = vst [vmem:[#allocation2 + $0x98] sm:$0xff] %v1792
        %1857 = vst [vmem:[#allocation2 + $0xa0] sm:$0xff] %v1793
        %1858 = vst [vmem:[#allocation2 + $0xa8] sm:$0xff] %v1794
        %1859 = vst [vmem:[#allocation2 + $0xb0] sm:$0xff] %v1795
        %1860 = vst [vmem:[#allocation2 + $0xb8] sm:$0xff] %v1796
        %1861 = vst [vmem:[#allocation2 + $0xc0] sm:$0xff] %v1797
        %1862 = vst [vmem:[#allocation2 + $0xc8] sm:$0xff] %v1798
        %1863 = vst [vmem:[#allocation2 + $0xd0] sm:$0xff] %v1799
        %1864 = vst [vmem:[#allocation2 + $0xd8] sm:$0xff] %v1800
        %1865 = vst [vmem:[#allocation2 + $0xe0] sm:$0xff] %v1801
        %1866 = vst [vmem:[#allocation2 + $0xe8] sm:$0xff] %v1802
        %1867 = vst [vmem:[#allocation2 + $0xf0] sm:$0xff] %v1803
        %1868 = vst [vmem:[#allocation2 + $0xf8] sm:$0xff] %v1804
        %1869 = vst [vmem:[#allocation2 + $0x100] sm:$0xff] %v1805
        %1870 = vst [vmem:[#allocation2 + $0x108] sm:$0xff] %v1806
        %1871 = vst [vmem:[#allocation2 + $0x110] sm:$0xff] %v1807
        %1872 = vst [vmem:[#allocation2 + $0x118] sm:$0xff] %v1808
        %1873 = vst [vmem:[#allocation2 + $0x120] sm:$0xff] %v1809
        %1874 = vst [vmem:[#allocation2 + $0x128] sm:$0xff] %v1810
        %1875 = vst [vmem:[#allocation2 + $0x130] sm:$0xff] %v1811
        %1876 = vst [vmem:[#allocation2 + $0x138] sm:$0xff] %v1812
        %1877 = vst [vmem:[#allocation2 + $0x140] sm:$0xff] %v1813
        %1878 = vst [vmem:[#allocation2 + $0x148] sm:$0xff] %v1814
        %1879 = vst [vmem:[#allocation2 + $0x150] sm:$0xff] %v1815
        %1880 = vst [vmem:[#allocation2 + $0x158] sm:$0xff] %v1816
        %1881 = vst [vmem:[#allocation2 + $0x160] sm:$0xff] %v1817
        %1882 = vst [vmem:[#allocation2 + $0x168] sm:$0xff] %v1818
        %1883 = vst [vmem:[#allocation2 + $0x170] sm:$0xff] %v1819
        %1884 = vst [vmem:[#allocation2 + $0x178] sm:$0xff] %v1820
        %1885 = vst [vmem:[#allocation2 + $0x180] sm:$0xff] %v1821
        %1886 = vst [vmem:[#allocation2 + $0x188] sm:$0xff] %v1822
        %1887 = vst [vmem:[#allocation2 + $0x190] sm:$0xff] %v1823
        %1888 = vst [vmem:[#allocation2 + $0x198] sm:$0xff] %v1824
        %1889 = vst [vmem:[#allocation2 + $0x1a0] sm:$0xff] %v1825
        %1890 = vst [vmem:[#allocation2 + $0x1a8] sm:$0xff] %v1826
        %1891 = vst [vmem:[#allocation2 + $0x1b0] sm:$0xff] %v1827
        %1892 = vst [vmem:[#allocation2 + $0x1b8] sm:$0xff] %v1828
        %1893 = vst [vmem:[#allocation2 + $0x1c0] sm:$0xff] %v1829
        %1894 = vst [vmem:[#allocation2 + $0x1c8] sm:$0xff] %v1830
        %1895 = vst [vmem:[#allocation2 + $0x1d0] sm:$0xff] %v1831
        %1896 = vst [vmem:[#allocation2 + $0x1d8] sm:$0xff] %v1832
        %1897 = vst [vmem:[#allocation2 + $0x1e0] sm:$0xff] %v1833
        %1898 = vst [vmem:[#allocation2 + $0x1e8] sm:$0xff] %v1834
        %1899 = vst [vmem:[#allocation2 + $0x1f0] sm:$0xff] %v1835
        %1900 = vst [vmem:[#allocation2 + $0x1f8] sm:$0xff] %v1836
        // Predicated region
        $region37: #{precompute_adapter_kv.1} parent=27 // pred_check
          %p1901 = pneg %p229
        $region38: #{precompute_adapter_kv.1} parent=27 // pred_check_branch
          %1903 = sbr.rel (%p1901) target = $region40
        $region39: #{precompute_adapter_kv.1} parent=27 // pred_region
          %v1904 = vld [vmem:[#allocation2] sm:$0xff]
          %v1905 = vld [vmem:[#allocation2 + $0x8] sm:$0xff]
          %v1906 = vld [vmem:[#allocation2 + $0x10] sm:$0xff]
          %v1907 = vld [vmem:[#allocation2 + $0x18] sm:$0xff]
          %v1908 = vld [vmem:[#allocation2 + $0x20] sm:$0xff]
          %v1909 = vld [vmem:[#allocation2 + $0x28] sm:$0xff]
          %v1910 = vld [vmem:[#allocation2 + $0x30] sm:$0xff]
          %v1911 = vld [vmem:[#allocation2 + $0x38] sm:$0xff]
          %v1912 = vld [vmem:[#allocation2 + $0x40] sm:$0xff]
          %v1913 = vld [vmem:[#allocation2 + $0x48] sm:$0xff]
          %v1914 = vld [vmem:[#allocation2 + $0x50] sm:$0xff]
          %v1915 = vld [vmem:[#allocation2 + $0x58] sm:$0xff]
          %v1916 = vld [vmem:[#allocation2 + $0x60] sm:$0xff]
          %v1917 = vld [vmem:[#allocation2 + $0x68] sm:$0xff]
          %v1918 = vld [vmem:[#allocation2 + $0x70] sm:$0xff]
          %v1919 = vld [vmem:[#allocation2 + $0x78] sm:$0xff]
          %v1920 = vld [vmem:[#allocation2 + $0x80] sm:$0xff]
          %v1921 = vld [vmem:[#allocation2 + $0x88] sm:$0xff]
          %v1922 = vld [vmem:[#allocation2 + $0x90] sm:$0xff]
          %v1923 = vld [vmem:[#allocation2 + $0x98] sm:$0xff]
          %v1924 = vld [vmem:[#allocation2 + $0xa0] sm:$0xff]
          %v1925 = vld [vmem:[#allocation2 + $0xa8] sm:$0xff]
          %v1926 = vld [vmem:[#allocation2 + $0xb0] sm:$0xff]
          %v1927 = vld [vmem:[#allocation2 + $0xb8] sm:$0xff]
          %v1928 = vld [vmem:[#allocation2 + $0xc0] sm:$0xff]
          %v1929 = vld [vmem:[#allocation2 + $0xc8] sm:$0xff]
          %v1930 = vld [vmem:[#allocation2 + $0xd0] sm:$0xff]
          %v1931 = vld [vmem:[#allocation2 + $0xd8] sm:$0xff]
          %v1932 = vld [vmem:[#allocation2 + $0xe0] sm:$0xff]
          %v1933 = vld [vmem:[#allocation2 + $0xe8] sm:$0xff]
          %v1934 = vld [vmem:[#allocation2 + $0xf0] sm:$0xff]
          %v1935 = vld [vmem:[#allocation2 + $0xf8] sm:$0xff]
          %v1936 = vld [vmem:[#allocation2 + $0x100] sm:$0xff]
          %v1937 = vld [vmem:[#allocation2 + $0x108] sm:$0xff]
          %v1938 = vld [vmem:[#allocation2 + $0x110] sm:$0xff]
          %v1939 = vld [vmem:[#allocation2 + $0x118] sm:$0xff]
          %v1940 = vld [vmem:[#allocation2 + $0x120] sm:$0xff]
          %v1941 = vld [vmem:[#allocation2 + $0x128] sm:$0xff]
          %v1942 = vld [vmem:[#allocation2 + $0x130] sm:$0xff]
          %v1943 = vld [vmem:[#allocation2 + $0x138] sm:$0xff]
          %v1944 = vld [vmem:[#allocation2 + $0x140] sm:$0xff]
          %v1945 = vld [vmem:[#allocation2 + $0x148] sm:$0xff]
          %v1946 = vld [vmem:[#allocation2 + $0x150] sm:$0xff]
          %v1947 = vld [vmem:[#allocation2 + $0x158] sm:$0xff]
          %v1948 = vld [vmem:[#allocation2 + $0x160] sm:$0xff]
          %v1949 = vld [vmem:[#allocation2 + $0x168] sm:$0xff]
          %v1950 = vld [vmem:[#allocation2 + $0x170] sm:$0xff]
          %v1951 = vld [vmem:[#allocation2 + $0x178] sm:$0xff]
          %v1952 = vld [vmem:[#allocation2 + $0x180] sm:$0xff]
          %v1953 = vld [vmem:[#allocation2 + $0x188] sm:$0xff]
          %v1954 = vld [vmem:[#allocation2 + $0x190] sm:$0xff]
          %v1955 = vld [vmem:[#allocation2 + $0x198] sm:$0xff]
          %v1956 = vld [vmem:[#allocation2 + $0x1a0] sm:$0xff]
          %v1957 = vld [vmem:[#allocation2 + $0x1a8] sm:$0xff]
          %v1958 = vld [vmem:[#allocation2 + $0x1b0] sm:$0xff]
          %v1959 = vld [vmem:[#allocation2 + $0x1b8] sm:$0xff]
          %v1960 = vld [vmem:[#allocation2 + $0x1c0] sm:$0xff]
          %v1961 = vld [vmem:[#allocation2 + $0x1c8] sm:$0xff]
          %v1962 = vld [vmem:[#allocation2 + $0x1d0] sm:$0xff]
          %v1963 = vld [vmem:[#allocation2 + $0x1d8] sm:$0xff]
          %v1964 = vld [vmem:[#allocation2 + $0x1e0] sm:$0xff]
          %v1965 = vld [vmem:[#allocation2 + $0x1e8] sm:$0xff]
          %v1966 = vld [vmem:[#allocation2 + $0x1f0] sm:$0xff]
          %v1967 = vld [vmem:[#allocation2 + $0x1f8] sm:$0xff]
          %v1968 = vpack.c.bf16 %v1908, %v1904
          %v1969 = vpack.c.bf16 %v1909, %v1905
          %v1970 = vpack.c.bf16 %v1910, %v1906
          %v1971 = vpack.c.bf16 %v1911, %v1907
          %v1972 = vpack.c.bf16 %v1916, %v1912
          %v1973 = vpack.c.bf16 %v1917, %v1913
          %v1974 = vpack.c.bf16 %v1918, %v1914
          %v1975 = vpack.c.bf16 %v1919, %v1915
          %v1976 = vpack.c.bf16 %v1924, %v1920
          %v1977 = vpack.c.bf16 %v1925, %v1921
          %v1978 = vpack.c.bf16 %v1926, %v1922
          %v1979 = vpack.c.bf16 %v1927, %v1923
          %v1980 = vpack.c.bf16 %v1932, %v1928
          %v1981 = vpack.c.bf16 %v1933, %v1929
          %v1982 = vpack.c.bf16 %v1934, %v1930
          %v1983 = vpack.c.bf16 %v1935, %v1931
          %v1984 = vpack.c.bf16 %v1940, %v1936
          %v1985 = vpack.c.bf16 %v1941, %v1937
          %v1986 = vpack.c.bf16 %v1942, %v1938
          %v1987 = vpack.c.bf16 %v1943, %v1939
          %v1988 = vpack.c.bf16 %v1948, %v1944
          %v1989 = vpack.c.bf16 %v1949, %v1945
          %v1990 = vpack.c.bf16 %v1950, %v1946
          %v1991 = vpack.c.bf16 %v1951, %v1947
          %v1992 = vpack.c.bf16 %v1956, %v1952
          %v1993 = vpack.c.bf16 %v1957, %v1953
          %v1994 = vpack.c.bf16 %v1958, %v1954
          %v1995 = vpack.c.bf16 %v1959, %v1955
          %v1996 = vpack.c.bf16 %v1964, %v1960
          %v1997 = vpack.c.bf16 %v1965, %v1961
          %v1998 = vpack.c.bf16 %v1966, %v1962
          %v1999 = vpack.c.bf16 %v1967, %v1963
          %v2032 = vunpack.c.l.b16 %v1968
          %v2033 = vunpack.c.l.b16 %v1969
          %v2034 = vunpack.c.l.b16 %v1970
          %v2035 = vunpack.c.l.b16 %v1971
          %v2036 = vunpack.c.h.b16 %v1968
          %v2037 = vunpack.c.h.b16 %v1969
          %v2038 = vunpack.c.h.b16 %v1970
          %v2039 = vunpack.c.h.b16 %v1971
          %v2040 = vunpack.c.l.b16 %v1972
          %v2041 = vunpack.c.l.b16 %v1973
          %v2042 = vunpack.c.l.b16 %v1974
          %v2043 = vunpack.c.l.b16 %v1975
          %v2044 = vunpack.c.h.b16 %v1972
          %v2045 = vunpack.c.h.b16 %v1973
          %v2046 = vunpack.c.h.b16 %v1974
          %v2047 = vunpack.c.h.b16 %v1975
          %v2048 = vunpack.c.l.b16 %v1976
          %v2049 = vunpack.c.l.b16 %v1977
          %v2050 = vunpack.c.l.b16 %v1978
          %v2051 = vunpack.c.l.b16 %v1979
          %v2052 = vunpack.c.h.b16 %v1976
          %v2053 = vunpack.c.h.b16 %v1977
          %v2054 = vunpack.c.h.b16 %v1978
          %v2055 = vunpack.c.h.b16 %v1979
          %v2056 = vunpack.c.l.b16 %v1980
          %v2057 = vunpack.c.l.b16 %v1981
          %v2058 = vunpack.c.l.b16 %v1982
          %v2059 = vunpack.c.l.b16 %v1983
          %v2060 = vunpack.c.h.b16 %v1980
          %v2061 = vunpack.c.h.b16 %v1981
          %v2062 = vunpack.c.h.b16 %v1982
          %v2063 = vunpack.c.h.b16 %v1983
          %v2064 = vunpack.c.l.b16 %v1984
          %v2065 = vunpack.c.l.b16 %v1985
          %v2066 = vunpack.c.l.b16 %v1986
          %v2067 = vunpack.c.l.b16 %v1987
          %v2068 = vunpack.c.h.b16 %v1984
          %v2069 = vunpack.c.h.b16 %v1985
          %v2070 = vunpack.c.h.b16 %v1986
          %v2071 = vunpack.c.h.b16 %v1987
          %v2072 = vunpack.c.l.b16 %v1988
          %v2073 = vunpack.c.l.b16 %v1989
          %v2074 = vunpack.c.l.b16 %v1990
          %v2075 = vunpack.c.l.b16 %v1991
          %v2076 = vunpack.c.h.b16 %v1988
          %v2077 = vunpack.c.h.b16 %v1989
          %v2078 = vunpack.c.h.b16 %v1990
          %v2079 = vunpack.c.h.b16 %v1991
          %v2080 = vunpack.c.l.b16 %v1992
          %v2081 = vunpack.c.l.b16 %v1993
          %v2082 = vunpack.c.l.b16 %v1994
          %v2083 = vunpack.c.l.b16 %v1995
          %v2084 = vunpack.c.h.b16 %v1992
          %v2085 = vunpack.c.h.b16 %v1993
          %v2086 = vunpack.c.h.b16 %v1994
          %v2087 = vunpack.c.h.b16 %v1995
          %v2088 = vunpack.c.l.b16 %v1996
          %v2089 = vunpack.c.l.b16 %v1997
          %v2090 = vunpack.c.l.b16 %v1998
          %v2091 = vunpack.c.l.b16 %v1999
          %v2092 = vunpack.c.h.b16 %v1996
          %v2093 = vunpack.c.h.b16 %v1997
          %v2094 = vunpack.c.h.b16 %v1998
          %v2095 = vunpack.c.h.b16 %v1999
          %v2096 = vpack.c.b16 %v2033, %v2032
          %v2097 = vpack.c.b16 %v2035, %v2034
          %v2098 = vpack.c.b16 %v2037, %v2036
          %v2099 = vpack.c.b16 %v2039, %v2038
          %v2100 = vpack.c.b16 %v2041, %v2040
          %v2101 = vpack.c.b16 %v2043, %v2042
          %v2102 = vpack.c.b16 %v2045, %v2044
          %v2103 = vpack.c.b16 %v2047, %v2046
          %v2104 = vpack.c.b16 %v2049, %v2048
          %v2105 = vpack.c.b16 %v2051, %v2050
          %v2106 = vpack.c.b16 %v2053, %v2052
          %v2107 = vpack.c.b16 %v2055, %v2054
          %v2108 = vpack.c.b16 %v2057, %v2056
          %v2109 = vpack.c.b16 %v2059, %v2058
          %v2110 = vpack.c.b16 %v2061, %v2060
          %v2111 = vpack.c.b16 %v2063, %v2062
          %v2112 = vpack.c.b16 %v2065, %v2064
          %v2113 = vpack.c.b16 %v2067, %v2066
          %v2114 = vpack.c.b16 %v2069, %v2068
          %v2115 = vpack.c.b16 %v2071, %v2070
          %v2116 = vpack.c.b16 %v2073, %v2072
          %v2117 = vpack.c.b16 %v2075, %v2074
          %v2118 = vpack.c.b16 %v2077, %v2076
          %v2119 = vpack.c.b16 %v2079, %v2078
          %v2120 = vpack.c.b16 %v2081, %v2080
          %v2121 = vpack.c.b16 %v2083, %v2082
          %v2122 = vpack.c.b16 %v2085, %v2084
          %v2123 = vpack.c.b16 %v2087, %v2086
          %v2124 = vpack.c.b16 %v2089, %v2088
          %v2125 = vpack.c.b16 %v2091, %v2090
          %v2126 = vpack.c.b16 %v2093, %v2092
          %v2127 = vpack.c.b16 %v2095, %v2094
          %2160 = vst [vmem:[%s212] sm:$0xff] %v2096
          %2161 = vst [vmem:[%s212 + $0x8] sm:$0xff] %v2097
          %2162 = vst [vmem:[%s212 + $0x10] sm:$0xff] %v2098
          %2163 = vst [vmem:[%s212 + $0x18] sm:$0xff] %v2099
          %2164 = vst [vmem:[%s212 + $0x20] sm:$0xff] %v2100
          %2165 = vst [vmem:[%s212 + $0x28] sm:$0xff] %v2101
          %2166 = vst [vmem:[%s212 + $0x30] sm:$0xff] %v2102
          %2167 = vst [vmem:[%s212 + $0x38] sm:$0xff] %v2103
          %2168 = vst [vmem:[%s212 + $0x40] sm:$0xff] %v2104
          %2169 = vst [vmem:[%s212 + $0x48] sm:$0xff] %v2105
          %2170 = vst [vmem:[%s212 + $0x50] sm:$0xff] %v2106
          %2171 = vst [vmem:[%s212 + $0x58] sm:$0xff] %v2107
          %2172 = vst [vmem:[%s212 + $0x60] sm:$0xff] %v2108
          %2173 = vst [vmem:[%s212 + $0x68] sm:$0xff] %v2109
          %2174 = vst [vmem:[%s212 + $0x70] sm:$0xff] %v2110
          %2175 = vst [vmem:[%s212 + $0x78] sm:$0xff] %v2111
          %2176 = vst [vmem:[%s212 + $0x80] sm:$0xff] %v2112
          %2177 = vst [vmem:[%s212 + $0x88] sm:$0xff] %v2113
          %2178 = vst [vmem:[%s212 + $0x90] sm:$0xff] %v2114
          %2179 = vst [vmem:[%s212 + $0x98] sm:$0xff] %v2115
          %2180 = vst [vmem:[%s212 + $0xa0] sm:$0xff] %v2116
          %2181 = vst [vmem:[%s212 + $0xa8] sm:$0xff] %v2117
          %2182 = vst [vmem:[%s212 + $0xb0] sm:$0xff] %v2118
          %2183 = vst [vmem:[%s212 + $0xb8] sm:$0xff] %v2119
          %2184 = vst [vmem:[%s212 + $0xc0] sm:$0xff] %v2120
          %2185 = vst [vmem:[%s212 + $0xc8] sm:$0xff] %v2121
          %2186 = vst [vmem:[%s212 + $0xd0] sm:$0xff] %v2122
          %2187 = vst [vmem:[%s212 + $0xd8] sm:$0xff] %v2123
          %2188 = vst [vmem:[%s212 + $0xe0] sm:$0xff] %v2124
          %2189 = vst [vmem:[%s212 + $0xe8] sm:$0xff] %v2125
          %2190 = vst [vmem:[%s212 + $0xf0] sm:$0xff] %v2126
          %2191 = vst [vmem:[%s212 + $0xf8] sm:$0xff] %v2127
        $region40: #{precompute_adapter_kv.1} parent=27 // pred_fallthru
          _
        %s2192 = sand.u32 %s101, 1
        %s2193 = sand.u32 %s101, 1
        %s2194 = smul.addr %s2193, 256
        %s2195 = scalar_lea.vmem [#allocation5], %s2194
        // Predicated region
        $region41: #{precompute_adapter_kv.1} parent=27 // pred_check
          %p2196 = pneg %p111
        $region42: #{precompute_adapter_kv.1} parent=27 // pred_check_branch
          %2198 = sbr.rel (%p2196) target = $region44
        $region43: #{precompute_adapter_kv.1} parent=27 // pred_region
          %s2199 = smul.u32 16, %s21
          %s2200 = smul.u32 4, %s22
          %s2201 = smul.addr %s2199, 12
          %s2202 = sadd.s32 %s2200, %s2201
          %s2203 = smul.addr %s2202, 4
          %s2204 = scalar_lea.vmem %s2, %s2203
          // Predicated region
          $region45: #{precompute_adapter_kv.1} parent=43 // pred_check
            _
          $region46: #{precompute_adapter_kv.1} parent=43 // pred_check_branch
            %2206 = sbr.rel (0) target = $region48
          $region47: #{precompute_adapter_kv.1} parent=43 // pred_region
            // Predicated region
            $region49: #{precompute_adapter_kv.1} parent=47 // pred_check
              _
            $region50: #{precompute_adapter_kv.1} parent=47 // pred_check_branch
              %2208 = sbr.rel (0) target = $region52
            $region51: #{precompute_adapter_kv.1} parent=47 // pred_region
              loop: start=0, step=1, limit=1
              $region53: #{precompute_adapter_kv.1} parent=51 // loop_pre_header
                _
              $region54: #{precompute_adapter_kv.1} parent=51 // loop_header
                %s2210 = sphi 0, %s2214
                %p2211 = scmp.ge.s32.totalorder %s2210, 1
                %s2215 = sphi %s2195, %s2195
                %s2216 = sphi %s2204, %s2204
              $region55: #{precompute_adapter_kv.1} parent=51 // loop_header_branch
                %2213 = sbr.rel (%p2211) target = $region59
              $region56: #{precompute_adapter_kv.1} parent=51 // loop_body
                %v2217 = vld [vmem:[%s2215] sm:$0xff]
                %2218 = vst [vmem:[%s2216] sm:$0xff] %v2217
                %v2219 = vld [vmem:[%s2215 + $0x8] sm:$0xff]
                %2220 = vst [vmem:[%s2216 + $0x8] sm:$0xff] %v2219
                %v2221 = vld [vmem:[%s2215 + $0x10] sm:$0xff]
                %2222 = vst [vmem:[%s2216 + $0x30] sm:$0xff] %v2221
                %v2223 = vld [vmem:[%s2215 + $0x18] sm:$0xff]
                %2224 = vst [vmem:[%s2216 + $0x38] sm:$0xff] %v2223
                %v2225 = vld [vmem:[%s2215 + $0x20] sm:$0xff]
                %2226 = vst [vmem:[%s2216 + $0x60] sm:$0xff] %v2225
                %v2227 = vld [vmem:[%s2215 + $0x28] sm:$0xff]
                %2228 = vst [vmem:[%s2216 + $0x68] sm:$0xff] %v2227
                %v2229 = vld [vmem:[%s2215 + $0x30] sm:$0xff]
                %2230 = vst [vmem:[%s2216 + $0x90] sm:$0xff] %v2229
                %v2231 = vld [vmem:[%s2215 + $0x38] sm:$0xff]
                %2232 = vst [vmem:[%s2216 + $0x98] sm:$0xff] %v2231
                %v2233 = vld [vmem:[%s2215 + $0x40] sm:$0xff]
                %2234 = vst [vmem:[%s2216 + $0xc0] sm:$0xff] %v2233
                %v2235 = vld [vmem:[%s2215 + $0x48] sm:$0xff]
                %2236 = vst [vmem:[%s2216 + $0xc8] sm:$0xff] %v2235
                %v2237 = vld [vmem:[%s2215 + $0x50] sm:$0xff]
                %2238 = vst [vmem:[%s2216 + $0xf0] sm:$0xff] %v2237
                %v2239 = vld [vmem:[%s2215 + $0x58] sm:$0xff]
                %2240 = vst [vmem:[%s2216 + $0xf8] sm:$0xff] %v2239
                %v2241 = vld [vmem:[%s2215 + $0x60] sm:$0xff]
                %2242 = vst [vmem:[%s2216 + $0x120] sm:$0xff] %v2241
                %v2243 = vld [vmem:[%s2215 + $0x68] sm:$0xff]
                %2244 = vst [vmem:[%s2216 + $0x128] sm:$0xff] %v2243
                %v2245 = vld [vmem:[%s2215 + $0x70] sm:$0xff]
                %2246 = vst [vmem:[%s2216 + $0x150] sm:$0xff] %v2245
                %v2247 = vld [vmem:[%s2215 + $0x78] sm:$0xff]
                %2248 = vst [vmem:[%s2216 + $0x158] sm:$0xff] %v2247
                %v2249 = vld [vmem:[%s2215 + $0x80] sm:$0xff]
                %2250 = vst [vmem:[%s2216 + $0x180] sm:$0xff] %v2249
                %v2251 = vld [vmem:[%s2215 + $0x88] sm:$0xff]
                %2252 = vst [vmem:[%s2216 + $0x188] sm:$0xff] %v2251
                %v2253 = vld [vmem:[%s2215 + $0x90] sm:$0xff]
                %2254 = vst [vmem:[%s2216 + $0x1b0] sm:$0xff] %v2253
                %v2255 = vld [vmem:[%s2215 + $0x98] sm:$0xff]
                %2256 = vst [vmem:[%s2216 + $0x1b8] sm:$0xff] %v2255
                %v2257 = vld [vmem:[%s2215 + $0xa0] sm:$0xff]
                %2258 = vst [vmem:[%s2216 + $0x1e0] sm:$0xff] %v2257
                %v2259 = vld [vmem:[%s2215 + $0xa8] sm:$0xff]
                %2260 = vst [vmem:[%s2216 + $0x1e8] sm:$0xff] %v2259
                %v2261 = vld [vmem:[%s2215 + $0xb0] sm:$0xff]
                %2262 = vst [vmem:[%s2216 + $0x210] sm:$0xff] %v2261
                %v2263 = vld [vmem:[%s2215 + $0xb8] sm:$0xff]
                %2264 = vst [vmem:[%s2216 + $0x218] sm:$0xff] %v2263
                %v2265 = vld [vmem:[%s2215 + $0xc0] sm:$0xff]
                %2266 = vst [vmem:[%s2216 + $0x240] sm:$0xff] %v2265
                %v2267 = vld [vmem:[%s2215 + $0xc8] sm:$0xff]
                %2268 = vst [vmem:[%s2216 + $0x248] sm:$0xff] %v2267
                %v2269 = vld [vmem:[%s2215 + $0xd0] sm:$0xff]
                %2270 = vst [vmem:[%s2216 + $0x270] sm:$0xff] %v2269
                %v2271 = vld [vmem:[%s2215 + $0xd8] sm:$0xff]
                %2272 = vst [vmem:[%s2216 + $0x278] sm:$0xff] %v2271
                %v2273 = vld [vmem:[%s2215 + $0xe0] sm:$0xff]
                %2274 = vst [vmem:[%s2216 + $0x2a0] sm:$0xff] %v2273
                %v2275 = vld [vmem:[%s2215 + $0xe8] sm:$0xff]
                %2276 = vst [vmem:[%s2216 + $0x2a8] sm:$0xff] %v2275
                %v2277 = vld [vmem:[%s2215 + $0xf0] sm:$0xff]
                %2278 = vst [vmem:[%s2216 + $0x2d0] sm:$0xff] %v2277
                %v2279 = vld [vmem:[%s2215 + $0xf8] sm:$0xff]
                %2280 = vst [vmem:[%s2216 + $0x2d8] sm:$0xff] %v2279
              $region57: #{precompute_adapter_kv.1} parent=51 // loop_footer
                %s2214 = sadd.s32 1, %s2210
              $region58: #{precompute_adapter_kv.1} parent=51 // loop_footer_branch
                %2209 = sbr.rel target = $region54
              $region59: #{precompute_adapter_kv.1} parent=51 // loop_exit
                _
            $region52: #{precompute_adapter_kv.1} parent=47 // pred_fallthru
              _
            // Predicated region
            $region60: #{precompute_adapter_kv.1} parent=47 // pred_check
              _
            $region61: #{precompute_adapter_kv.1} parent=47 // pred_check_branch
              %2282 = sbr.rel target = $region63
            $region62: #{precompute_adapter_kv.1} parent=47 // pred_region
              _
            $region63: #{precompute_adapter_kv.1} parent=47 // pred_fallthru
              _
          $region48: #{precompute_adapter_kv.1} parent=43 // pred_fallthru
            _
          %2283 = vnop
        $region44: #{precompute_adapter_kv.1} parent=27 // pred_fallthru
          _
      $region28: #{precompute_adapter_kv.1} parent=5 // pred_fallthru
        _
      %p2284 = scmp.le.s32.totalorder 2, %s11
      // Predicated region
      $region64: #{precompute_adapter_kv.1} parent=5 // pred_check
        %p2285 = pneg %p2284
      $region65: #{precompute_adapter_kv.1} parent=5 // pred_check_branch
        %2287 = sbr.rel (%p2285) target = $region67
      $region66: #{precompute_adapter_kv.1} parent=5 // pred_region
        %s2288 = ssub.s32 %s11, 2
        // Predicated region
        $region68: #{precompute_adapter_kv.1} parent=66 // pred_check
          %p2289 = pneg %p117
        $region69: #{precompute_adapter_kv.1} parent=66 // pred_check_branch
          %2291 = sbr.rel (%p2289) target = $region71
        $region70: #{precompute_adapter_kv.1} parent=66 // pred_region
          %s2292 = sand.u32 %s102, 1
          %s2293 = sand.u32 %s102, 1
          %s2294 = smul.addr %s2293, 256
          %s2295 = scalar_lea.vmem [#allocation5], %s2294
        $region71: #{precompute_adapter_kv.1} parent=66 // pred_fallthru
          _
      $region67: #{precompute_adapter_kv.1} parent=5 // pred_fallthru
        _
    $region6: #{precompute_adapter_kv.1} parent=1 // loop_footer
      %s15 = sadd.s32 1, %s11
    $region7: #{precompute_adapter_kv.1} parent=1 // loop_footer_branch
      %10 = sbr.rel target = $region3
    $region8: #{precompute_adapter_kv.1} parent=1 // loop_exit
      _
    %2296 = vsyncpa [#allocation4], 1
    %s2297 = scalar_lea.sflag [#allocation4], 1
    %2298 = vsyncpa %s2297, 1

</llo_original>
